<compile_context>
chip_gen: v5e
topology: v5e:2x2
jax: 0.10.0
libtpu: 0.0.40
codegen_flags: <defaults>
</compile_context>

<pallas_src>
import functools

import jax
import jax.numpy as jnp
import numpy as np
from jax.experimental import pallas as pl
from jax.experimental.pallas import tpu as pltpu


def _attn_skip_norm_kernel(q_ref, k_ref, v_ref,
                           wq_ref, wk_ref, wv_ref, wo_ref,
                           bq_ref, bk_ref, bv_ref, bo_ref,
                           gamma_ref, beta_ref,
                           o_ref, *, num_heads, eps):
    """One grid step = `block_b` batch elements, all heads."""
    Bblk, Lq, E = q_ref.shape
    _, Lk, Dk = k_ref.shape
    _, _, Dv = v_ref.shape
    hd = E // num_heads

    # Flatten batch*seq so the projections and LayerNorm see a tall M.
    # (Leading-dim-only reshapes: Lq/Lk are multiples of 8, so these are free relabels.)
    q2 = q_ref[...].reshape(Bblk * Lq, E).astype(jnp.float32)
    k2 = k_ref[...].reshape(Bblk * Lk, Dk).astype(jnp.float32)
    v2 = v_ref[...].reshape(Bblk * Lk, Dv).astype(jnp.float32)

    acc = jnp.zeros((Bblk * Lq, E), jnp.float32)
    for h in range(num_heads):  # static loop; the per-head dots are independent
        # Per-head projections: weights pre-split at prep time -> no in-kernel lane slicing.
        qh = jnp.dot(q2, wq_ref[h], preferred_element_type=jnp.float32) + bq_ref[h]
        kh = jnp.dot(k2, wk_ref[h], preferred_element_type=jnp.float32) + bk_ref[h]
        vh = jnp.dot(v2, wv_ref[h], preferred_element_type=jnp.float32) + bv_ref[h]
        qh = qh.reshape(Bblk, Lq, hd)   # leading-dim split only (no relayout)
        kh = kh.reshape(Bblk, Lk, hd)
        vh = vh.reshape(Bblk, Lk, hd)

        # Scores: 1/sqrt(hd) already folded into wq/bq at parameter-prep time.
        s = jnp.einsum("bqd,bkd->bqk", qh, kh, preferred_element_type=jnp.float32)
        s = s - jnp.max(s, axis=-1, keepdims=True)
        p = jnp.exp(s)
        p = p * pl.reciprocal(jnp.sum(p, axis=-1, keepdims=True), approx=True)
        ctx = jnp.einsum("bqk,bkd->bqd", p, vh, preferred_element_type=jnp.float32)

        # Output projection accumulated per head (== concat(heads) @ Wo^T, no concat).
        acc = acc + jnp.dot(ctx.reshape(Bblk * Lq, hd), wo_ref[h],
                            preferred_element_type=jnp.float32)

    attn = acc + bo_ref[...]

    # Residual + LayerNorm over the feature dim (kept in f32; fine on v5e too).
    x = q2 + attn
    mu = jnp.mean(x, axis=-1, keepdims=True)
    xc = x - mu
    var = jnp.mean(xc * xc, axis=-1, keepdims=True)
    y = xc * jax.lax.rsqrt(var + eps)
    y = y * gamma_ref[...] + beta_ref[...]

    o_ref[...] = y.astype(o_ref.dtype)


def prepare_params(params, *, num_heads):
    """One-time parameter prep: transpose to (in, out), split heads, fold 1/sqrt(hd).

    Done once (not per forward call), so no per-call HBM transpose/reshape ops.
    PyTorch weight convention: W is (out_features, in_features).
    """
    E = params["wq"].shape[0]
    H = num_heads
    hd = E // H
    scale = 1.0 / float(np.sqrt(hd))

    def split_cols(w_t):  # (in, E) -> (H, in, hd): per-head output-column blocks
        din = w_t.shape[0]
        return w_t.reshape(din, H, hd).transpose(1, 0, 2)

    wq_t = params["wq"].T * scale                      # fold softmax scale into Wq
    return {
        "wq_h": jnp.asarray(split_cols(wq_t), jnp.float32),               # (H, Dq, hd)
        "wk_h": jnp.asarray(split_cols(params["wk"].T), jnp.float32),     # (H, Dk, hd)
        "wv_h": jnp.asarray(split_cols(params["wv"].T), jnp.float32),     # (H, Dv, hd)
        "wo_h": jnp.asarray(params["wo"].T.reshape(H, hd, E), jnp.float32),  # (H, hd, E)
        "bq_h": jnp.asarray((params["bq"] * scale).reshape(H, 1, hd), jnp.float32),
        "bk_h": jnp.asarray(params["bk"].reshape(H, 1, hd), jnp.float32),
        "bv_h": jnp.asarray(params["bv"].reshape(H, 1, hd), jnp.float32),
        "bo": jnp.asarray(params["bo"].reshape(1, E), jnp.float32),
        "gamma": jnp.asarray(params["gamma"].reshape(1, E), jnp.float32),
        "beta": jnp.asarray(params["beta"].reshape(1, E), jnp.float32),
    }


def attention_with_skip_norm(q, k, v, prepped, *, num_heads, eps=1e-5, block_b=None):
    """q: (B, Lq, E); k: (B, Lk, Dk); v: (B, Lk, Dv); prepped = prepare_params(...)."""
    B, Lq, E = q.shape
    _, Lk, Dk = k.shape
    _, _, Dv = v.shape
    H = num_heads
    hd = E // H

    if block_b is None:
        # Toy shapes: take the whole batch in a single grid step (per-step overhead
        # dominates otherwise).  On v7x with larger B, pass block_b <= B // 2 so the
        # parallel grid axis shards across both TensorCores.
        block_b = B
    assert B % block_b == 0, "block_b must divide B"
    grid = (B // block_b,)

    kernel = functools.partial(_attn_skip_norm_kernel, num_heads=H, eps=eps)

    def _full(shape):
        return pl.BlockSpec(shape, lambda *_: (0,) * len(shape))

    out = pl.pallas_call(
        kernel,
        out_shape=jax.ShapeDtypeStruct((B * Lq, E), q.dtype),
        grid_spec=pltpu.PrefetchScalarGridSpec(
            num_scalar_prefetch=0,
            grid=grid,
            in_specs=[
                pl.BlockSpec((block_b, Lq, E), lambda i: (i, 0, 0)),
                pl.BlockSpec((block_b, Lk, Dk), lambda i: (i, 0, 0)),
                pl.BlockSpec((block_b, Lk, Dv), lambda i: (i, 0, 0)),
                _full((H, E, hd)),    # wq_h  (1/sqrt(hd) folded in)
                _full((H, Dk, hd)),   # wk_h
                _full((H, Dv, hd)),   # wv_h
                _full((H, hd, E)),    # wo_h
                _full((H, 1, hd)),    # bq_h (scaled)
                _full((H, 1, hd)),    # bk_h
                _full((H, 1, hd)),    # bv_h
                _full((1, E)),        # bo
                _full((1, E)),        # gamma
                _full((1, E)),        # beta
            ],
            out_specs=pl.BlockSpec((block_b * Lq, E), lambda i: (i, 0)),
        ),
        compiler_params=pltpu.CompilerParams(
            dimension_semantics=("parallel",)),
    )(q, k, v,
      prepped["wq_h"], prepped["wk_h"], prepped["wv_h"], prepped["wo_h"],
      prepped["bq_h"], prepped["bk_h"], prepped["bv_h"], prepped["bo"],
      prepped["gamma"], prepped["beta"])
    return out.reshape(B, Lq, E)


def _reference(q, k, v, params, *, num_heads, eps=1e-5):
    """Pure-JAX reference of nn.MultiheadAttention + residual + LayerNorm."""
    B, Lq, E = q.shape
    hd = E // num_heads
    Q = q @ params["wq"].T + params["bq"]
    K = k @ params["wk"].T + params["bk"]
    V = v @ params["wv"].T + params["bv"]
    Qh = Q.reshape(B, Lq, num_heads, hd).transpose(0, 2, 1, 3)
    Kh = K.reshape(B, -1, num_heads, hd).transpose(0, 2, 1, 3)
    Vh = V.reshape(B, -1, num_heads, hd).transpose(0, 2, 1, 3)
    s = jnp.einsum("bhqd,bhkd->bhqk", Qh, Kh) / jnp.sqrt(jnp.float32(hd))
    p = jax.nn.softmax(s, axis=-1)
    o = jnp.einsum("bhqk,bhkd->bhqd", p, Vh).transpose(0, 2, 1, 3).reshape(B, Lq, E)
    o = o @ params["wo"].T + params["bo"]
    x = q + o
    mu = jnp.mean(x, axis=-1, keepdims=True)
    var = jnp.mean((x - mu) ** 2, axis=-1, keepdims=True)
    return (x - mu) * jax.lax.rsqrt(var + eps) * params["gamma"] + params["beta"]


if __name__ == "__main__":
    # Small shapes consistent with the module's forward.
    B, Lq, Lk = 2, 8, 8
    E, Dk, Dv = 32, 24, 16       # qdim, kdim, vdim
    H = 4                        # num_heads

    key = jax.random.PRNGKey(0)
    ks = jax.random.split(key, 16)
    q = jax.random.normal(ks[0], (B, Lq, E), jnp.float32)
    k = jax.random.normal(ks[1], (B, Lk, Dk), jnp.float32)
    v = jax.random.normal(ks[2], (B, Lk, Dv), jnp.float32)

    # Deterministic synthetic parameters (PyTorch weight convention: (out, in)).
    s = 0.1
    params = {
        "wq": s * jax.random.normal(ks[3], (E, E), jnp.float32),
        "wk": s * jax.random.normal(ks[4], (E, Dk), jnp.float32),
        "wv": s * jax.random.normal(ks[5], (E, Dv), jnp.float32),
        "wo": s * jax.random.normal(ks[6], (E, E), jnp.float32),
        "bq": s * jax.random.normal(ks[7], (E,), jnp.float32),
        "bk": s * jax.random.normal(ks[8], (E,), jnp.float32),
        "bv": s * jax.random.normal(ks[9], (E,), jnp.float32),
        "bo": s * jax.random.normal(ks[10], (E,), jnp.float32),
        "gamma": jnp.ones((E,), jnp.float32),
        "beta": jnp.zeros((E,), jnp.float32),
    }

    prepped = prepare_params(params, num_heads=H)   # one-time prep, not per call

    out = attention_with_skip_norm(q, k, v, prepped, num_heads=H)
    out = jax.block_until_ready(out)

    ref = jax.block_until_ready(_reference(q, k, v, params, num_heads=H))
    # Tolerance slightly looser than f32-exact because the softmax denominator uses
    # the EUP approximate reciprocal (pl.reciprocal(..., approx=True)).
    np.testing.assert_allclose(np.asarray(out), np.asarray(ref), atol=2e-3, rtol=2e-3)

    print("KERNEL_OK")
</pallas_src>

<mosaic_0001>
module attributes {stable_mosaic.version = 11 : i64} {
  func.func @_attn_skip_norm_kernel(%arg0: i32, %arg1: memref<2x8x32xf32, #tpu.memory_space<vmem>>, %arg2: memref<2x8x24xf32, #tpu.memory_space<vmem>>, %arg3: memref<2x8x16xf32, #tpu.memory_space<vmem>>, %arg4: memref<4x32x8xf32, #tpu.memory_space<vmem>>, %arg5: memref<4x24x8xf32, #tpu.memory_space<vmem>>, %arg6: memref<4x16x8xf32, #tpu.memory_space<vmem>>, %arg7: memref<4x8x32xf32, #tpu.memory_space<vmem>>, %arg8: memref<4x1x8xf32, #tpu.memory_space<vmem>>, %arg9: memref<4x1x8xf32, #tpu.memory_space<vmem>>, %arg10: memref<4x1x8xf32, #tpu.memory_space<vmem>>, %arg11: memref<1x32xf32, #tpu.memory_space<vmem>>, %arg12: memref<1x32xf32, #tpu.memory_space<vmem>>, %arg13: memref<1x32xf32, #tpu.memory_space<vmem>>, %arg14: memref<16x32xf32, #tpu.memory_space<vmem>>) attributes {dimension_semantics = [#tpu.dimension_semantics<parallel>], iteration_bounds = array<i64: 1>, scalar_prefetch = 0 : i64, scratch_operands = 0 : i64, tpu.core_type = #tpu.core_type<tc>, window_params = [{transform_indices = @transform_0, window_bounds = array<i64: 2, 8, 32>}, {transform_indices = @transform_1, window_bounds = array<i64: 2, 8, 24>}, {transform_indices = @transform_2, window_bounds = array<i64: 2, 8, 16>}, {pipeline_mode = #tpu.pipeline_mode<synchronous>, transform_indices = @transform_3, window_bounds = array<i64: 4, 32, 8>}, {pipeline_mode = #tpu.pipeline_mode<synchronous>, transform_indices = @transform_4, window_bounds = array<i64: 4, 24, 8>}, {pipeline_mode = #tpu.pipeline_mode<synchronous>, transform_indices = @transform_5, window_bounds = array<i64: 4, 16, 8>}, {pipeline_mode = #tpu.pipeline_mode<synchronous>, transform_indices = @transform_6, window_bounds = array<i64: 4, 8, 32>}, {pipeline_mode = #tpu.pipeline_mode<synchronous>, transform_indices = @transform_7, window_bounds = array<i64: 4, 1, 8>}, {pipeline_mode = #tpu.pipeline_mode<synchronous>, transform_indices = @transform_8, window_bounds = array<i64: 4, 1, 8>}, {pipeline_mode = #tpu.pipeline_mode<synchronous>, transform_indices = @transform_9, window_bounds = array<i64: 4, 1, 8>}, {pipeline_mode = #tpu.pipeline_mode<synchronous>, transform_indices = @transform_10, window_bounds = array<i64: 1, 32>}, {pipeline_mode = #tpu.pipeline_mode<synchronous>, transform_indices = @transform_11, window_bounds = array<i64: 1, 32>}, {pipeline_mode = #tpu.pipeline_mode<synchronous>, transform_indices = @transform_12, window_bounds = array<i64: 1, 32>}, {transform_indices = @transform_13, window_bounds = array<i64: 16, 32>}]} {
    %c0 = arith.constant 0 : index
    %c0_0 = arith.constant 0 : index
    %c0_1 = arith.constant 0 : index
    %0 = vector.load %arg1[%c0, %c0_0, %c0_1] : memref<2x8x32xf32, #tpu.memory_space<vmem>>, vector<2x8x32xf32>
    %1 = vector.shape_cast %0 : vector<2x8x32xf32> to vector<16x32xf32>
    %c0_2 = arith.constant 0 : index
    %c0_3 = arith.constant 0 : index
    %c0_4 = arith.constant 0 : index
    %2 = vector.load %arg2[%c0_2, %c0_3, %c0_4] : memref<2x8x24xf32, #tpu.memory_space<vmem>>, vector<2x8x24xf32>
    %3 = vector.shape_cast %2 : vector<2x8x24xf32> to vector<16x24xf32>
    %c0_5 = arith.constant 0 : index
    %c0_6 = arith.constant 0 : index
    %c0_7 = arith.constant 0 : index
    %4 = vector.load %arg3[%c0_5, %c0_6, %c0_7] : memref<2x8x16xf32, #tpu.memory_space<vmem>>, vector<2x8x16xf32>
    %5 = vector.shape_cast %4 : vector<2x8x16xf32> to vector<16x16xf32>
    %cst = arith.constant 0.000000e+00 : f32
    %6 = vector.broadcast %cst : f32 to vector<16x32xf32>
    %c0_8 = arith.constant 0 : index
    %c0_9 = arith.constant 0 : index
    %c0_10 = arith.constant 0 : index
    %7 = vector.load %arg4[%c0_8, %c0_9, %c0_10] : memref<4x32x8xf32, #tpu.memory_space<vmem>>, vector<1x32x8xf32>
    %8 = vector.shape_cast %7 : vector<1x32x8xf32> to vector<32x8xf32>
    %cst_11 = arith.constant dense<0.000000e+00> : vector<16x8xf32>
    %9 = tpu.matmul %1, %8, %cst_11 {dimension_numbers = #tpu.dot_dimension_numbers<[1], [0], [0], [1], [0, 0, 1, 1], [], []>} : vector<16x32xf32>, vector<32x8xf32>, vector<16x8xf32> -> vector<16x8xf32>
    %c0_12 = arith.constant 0 : index
    %c0_13 = arith.constant 0 : index
    %c0_14 = arith.constant 0 : index
    %10 = vector.load %arg8[%c0_12, %c0_13, %c0_14] : memref<4x1x8xf32, #tpu.memory_space<vmem>>, vector<1x1x8xf32>
    %11 = vector.shape_cast %10 : vector<1x1x8xf32> to vector<1x8xf32>
    %12 = vector.broadcast %11 : vector<1x8xf32> to vector<16x8xf32>
    %13 = arith.addf %9, %12 : vector<16x8xf32>
    %c0_15 = arith.constant 0 : index
    %c0_16 = arith.constant 0 : index
    %c0_17 = arith.constant 0 : index
    %14 = vector.load %arg5[%c0_15, %c0_16, %c0_17] : memref<4x24x8xf32, #tpu.memory_space<vmem>>, vector<1x24x8xf32>
    %15 = vector.shape_cast %14 : vector<1x24x8xf32> to vector<24x8xf32>
    %cst_18 = arith.constant dense<0.000000e+00> : vector<16x8xf32>
    %16 = tpu.matmul %3, %15, %cst_18 {dimension_numbers = #tpu.dot_dimension_numbers<[1], [0], [0], [1], [0, 0, 1, 1], [], []>} : vector<16x24xf32>, vector<24x8xf32>, vector<16x8xf32> -> vector<16x8xf32>
    %c0_19 = arith.constant 0 : index
    %c0_20 = arith.constant 0 : index
    %c0_21 = arith.constant 0 : index
    %17 = vector.load %arg9[%c0_19, %c0_20, %c0_21] : memref<4x1x8xf32, #tpu.memory_space<vmem>>, vector<1x1x8xf32>
    %18 = vector.shape_cast %17 : vector<1x1x8xf32> to vector<1x8xf32>
    %19 = vector.broadcast %18 : vector<1x8xf32> to vector<16x8xf32>
    %20 = arith.addf %16, %19 : vector<16x8xf32>
    %c0_22 = arith.constant 0 : index
    %c0_23 = arith.constant 0 : index
    %c0_24 = arith.constant 0 : index
    %21 = vector.load %arg6[%c0_22, %c0_23, %c0_24] : memref<4x16x8xf32, #tpu.memory_space<vmem>>, vector<1x16x8xf32>
    %22 = vector.shape_cast %21 : vector<1x16x8xf32> to vector<16x8xf32>
    %cst_25 = arith.constant dense<0.000000e+00> : vector<16x8xf32>
    %23 = tpu.matmul %5, %22, %cst_25 {dimension_numbers = #tpu.dot_dimension_numbers<[1], [0], [0], [1], [0, 0, 1, 1], [], []>} : vector<16x16xf32>, vector<16x8xf32>, vector<16x8xf32> -> vector<16x8xf32>
    %c0_26 = arith.constant 0 : index
    %c0_27 = arith.constant 0 : index
    %c0_28 = arith.constant 0 : index
    %24 = vector.load %arg10[%c0_26, %c0_27, %c0_28] : memref<4x1x8xf32, #tpu.memory_space<vmem>>, vector<1x1x8xf32>
    %25 = vector.shape_cast %24 : vector<1x1x8xf32> to vector<1x8xf32>
    %26 = vector.broadcast %25 : vector<1x8xf32> to vector<16x8xf32>
    %27 = arith.addf %23, %26 : vector<16x8xf32>
    %28 = vector.shape_cast %13 : vector<16x8xf32> to vector<2x8x8xf32>
    %29 = vector.shape_cast %20 : vector<16x8xf32> to vector<2x8x8xf32>
    %30 = vector.shape_cast %27 : vector<16x8xf32> to vector<2x8x8xf32>
    "tpu.trace_start"() <{level = 10 : i32, message = "bqd,bkd->bqk"}> : () -> ()
    %cst_29 = arith.constant dense<0.000000e+00> : vector<2x8x8xf32>
    %31 = tpu.matmul %28, %29, %cst_29 {dimension_numbers = #tpu.dot_dimension_numbers<[2], [2], [1], [1], [0, 0, 0, 1, 1, 1], [0], [0]>} : vector<2x8x8xf32>, vector<2x8x8xf32>, vector<2x8x8xf32> -> vector<2x8x8xf32>
    "tpu.trace_stop"() : () -> ()
    %cst_30 = arith.constant dense<0xFF800000> : vector<2x8xf32>
    %32 = vector.multi_reduction <maximumf>, %31, %cst_30 [2] : vector<2x8x8xf32> to vector<2x8xf32>
    %33 = vector.shape_cast %32 : vector<2x8xf32> to vector<2x8x1xf32>
    %34 = vector.broadcast %33 : vector<2x8x1xf32> to vector<2x8x8xf32>
    %35 = arith.subf %31, %34 : vector<2x8x8xf32>
    %36 = math.exp %35 : vector<2x8x8xf32>
    %cst_31 = arith.constant dense<0.000000e+00> : vector<2x8xf32>
    %37 = vector.multi_reduction <add>, %36, %cst_31 [2] : vector<2x8x8xf32> to vector<2x8xf32>
    %38 = vector.shape_cast %37 : vector<2x8xf32> to vector<2x8x1xf32>
    %39 = tpu.reciprocal %38 {approx = true} : vector<2x8x1xf32> -> vector<2x8x1xf32>
    %40 = vector.broadcast %39 : vector<2x8x1xf32> to vector<2x8x8xf32>
    %41 = arith.mulf %36, %40 : vector<2x8x8xf32>
    "tpu.trace_start"() <{level = 10 : i32, message = "bqk,bkd->bqd"}> : () -> ()
    %cst_32 = arith.constant dense<0.000000e+00> : vector<2x8x8xf32>
    %42 = tpu.matmul %41, %30, %cst_32 {dimension_numbers = #tpu.dot_dimension_numbers<[2], [1], [1], [2], [0, 0, 0, 1, 1, 2], [0], [0]>} : vector<2x8x8xf32>, vector<2x8x8xf32>, vector<2x8x8xf32> -> vector<2x8x8xf32>
    "tpu.trace_stop"() : () -> ()
    %43 = vector.shape_cast %42 : vector<2x8x8xf32> to vector<16x8xf32>
    %c0_33 = arith.constant 0 : index
    %c0_34 = arith.constant 0 : index
    %c0_35 = arith.constant 0 : index
    %44 = vector.load %arg7[%c0_33, %c0_34, %c0_35] : memref<4x8x32xf32, #tpu.memory_space<vmem>>, vector<1x8x32xf32>
    %45 = vector.shape_cast %44 : vector<1x8x32xf32> to vector<8x32xf32>
    %cst_36 = arith.constant dense<0.000000e+00> : vector<16x32xf32>
    %46 = tpu.matmul %43, %45, %cst_36 {dimension_numbers = #tpu.dot_dimension_numbers<[1], [0], [0], [1], [0, 0, 1, 1], [], []>} : vector<16x8xf32>, vector<8x32xf32>, vector<16x32xf32> -> vector<16x32xf32>
    %47 = arith.addf %6, %46 : vector<16x32xf32>
    %c1 = arith.constant 1 : index
    %c0_37 = arith.constant 0 : index
    %c0_38 = arith.constant 0 : index
    %48 = vector.load %arg4[%c1, %c0_37, %c0_38] : memref<4x32x8xf32, #tpu.memory_space<vmem>>, vector<1x32x8xf32>
    %49 = vector.shape_cast %48 : vector<1x32x8xf32> to vector<32x8xf32>
    %cst_39 = arith.constant dense<0.000000e+00> : vector<16x8xf32>
    %50 = tpu.matmul %1, %49, %cst_39 {dimension_numbers = #tpu.dot_dimension_numbers<[1], [0], [0], [1], [0, 0, 1, 1], [], []>} : vector<16x32xf32>, vector<32x8xf32>, vector<16x8xf32> -> vector<16x8xf32>
    %c1_40 = arith.constant 1 : index
    %c0_41 = arith.constant 0 : index
    %c0_42 = arith.constant 0 : index
    %51 = vector.load %arg8[%c1_40, %c0_41, %c0_42] : memref<4x1x8xf32, #tpu.memory_space<vmem>>, vector<1x1x8xf32>
    %52 = vector.shape_cast %51 : vector<1x1x8xf32> to vector<1x8xf32>
    %53 = vector.broadcast %52 : vector<1x8xf32> to vector<16x8xf32>
    %54 = arith.addf %50, %53 : vector<16x8xf32>
    %c1_43 = arith.constant 1 : index
    %c0_44 = arith.constant 0 : index
    %c0_45 = arith.constant 0 : index
    %55 = vector.load %arg5[%c1_43, %c0_44, %c0_45] : memref<4x24x8xf32, #tpu.memory_space<vmem>>, vector<1x24x8xf32>
    %56 = vector.shape_cast %55 : vector<1x24x8xf32> to vector<24x8xf32>
    %cst_46 = arith.constant dense<0.000000e+00> : vector<16x8xf32>
    %57 = tpu.matmul %3, %56, %cst_46 {dimension_numbers = #tpu.dot_dimension_numbers<[1], [0], [0], [1], [0, 0, 1, 1], [], []>} : vector<16x24xf32>, vector<24x8xf32>, vector<16x8xf32> -> vector<16x8xf32>
    %c1_47 = arith.constant 1 : index
    %c0_48 = arith.constant 0 : index
    %c0_49 = arith.constant 0 : index
    %58 = vector.load %arg9[%c1_47, %c0_48, %c0_49] : memref<4x1x8xf32, #tpu.memory_space<vmem>>, vector<1x1x8xf32>
    %59 = vector.shape_cast %58 : vector<1x1x8xf32> to vector<1x8xf32>
    %60 = vector.broadcast %59 : vector<1x8xf32> to vector<16x8xf32>
    %61 = arith.addf %57, %60 : vector<16x8xf32>
    %c1_50 = arith.constant 1 : index
    %c0_51 = arith.constant 0 : index
    %c0_52 = arith.constant 0 : index
    %62 = vector.load %arg6[%c1_50, %c0_51, %c0_52] : memref<4x16x8xf32, #tpu.memory_space<vmem>>, vector<1x16x8xf32>
    %63 = vector.shape_cast %62 : vector<1x16x8xf32> to vector<16x8xf32>
    %cst_53 = arith.constant dense<0.000000e+00> : vector<16x8xf32>
    %64 = tpu.matmul %5, %63, %cst_53 {dimension_numbers = #tpu.dot_dimension_numbers<[1], [0], [0], [1], [0, 0, 1, 1], [], []>} : vector<16x16xf32>, vector<16x8xf32>, vector<16x8xf32> -> vector<16x8xf32>
    %c1_54 = arith.constant 1 : index
    %c0_55 = arith.constant 0 : index
    %c0_56 = arith.constant 0 : index
    %65 = vector.load %arg10[%c1_54, %c0_55, %c0_56] : memref<4x1x8xf32, #tpu.memory_space<vmem>>, vector<1x1x8xf32>
    %66 = vector.shape_cast %65 : vector<1x1x8xf32> to vector<1x8xf32>
    %67 = vector.broadcast %66 : vector<1x8xf32> to vector<16x8xf32>
    %68 = arith.addf %64, %67 : vector<16x8xf32>
    %69 = vector.shape_cast %54 : vector<16x8xf32> to vector<2x8x8xf32>
    %70 = vector.shape_cast %61 : vector<16x8xf32> to vector<2x8x8xf32>
    %71 = vector.shape_cast %68 : vector<16x8xf32> to vector<2x8x8xf32>
    "tpu.trace_start"() <{level = 10 : i32, message = "bqd,bkd->bqk"}> : () -> ()
    %cst_57 = arith.constant dense<0.000000e+00> : vector<2x8x8xf32>
    %72 = tpu.matmul %69, %70, %cst_57 {dimension_numbers = #tpu.dot_dimension_numbers<[2], [2], [1], [1], [0, 0, 0, 1, 1, 1], [0], [0]>} : vector<2x8x8xf32>, vector<2x8x8xf32>, vector<2x8x8xf32> -> vector<2x8x8xf32>
    "tpu.trace_stop"() : () -> ()
    %cst_58 = arith.constant dense<0xFF800000> : vector<2x8xf32>
    %73 = vector.multi_reduction <maximumf>, %72, %cst_58 [2] : vector<2x8x8xf32> to vector<2x8xf32>
    %74 = vector.shape_cast %73 : vector<2x8xf32> to vector<2x8x1xf32>
    %75 = vector.broadcast %74 : vector<2x8x1xf32> to vector<2x8x8xf32>
    %76 = arith.subf %72, %75 : vector<2x8x8xf32>
    %77 = math.exp %76 : vector<2x8x8xf32>
    %cst_59 = arith.constant dense<0.000000e+00> : vector<2x8xf32>
    %78 = vector.multi_reduction <add>, %77, %cst_59 [2] : vector<2x8x8xf32> to vector<2x8xf32>
    %79 = vector.shape_cast %78 : vector<2x8xf32> to vector<2x8x1xf32>
    %80 = tpu.reciprocal %79 {approx = true} : vector<2x8x1xf32> -> vector<2x8x1xf32>
    %81 = vector.broadcast %80 : vector<2x8x1xf32> to vector<2x8x8xf32>
    %82 = arith.mulf %77, %81 : vector<2x8x8xf32>
    "tpu.trace_start"() <{level = 10 : i32, message = "bqk,bkd->bqd"}> : () -> ()
    %cst_60 = arith.constant dense<0.000000e+00> : vector<2x8x8xf32>
    %83 = tpu.matmul %82, %71, %cst_60 {dimension_numbers = #tpu.dot_dimension_numbers<[2], [1], [1], [2], [0, 0, 0, 1, 1, 2], [0], [0]>} : vector<2x8x8xf32>, vector<2x8x8xf32>, vector<2x8x8xf32> -> vector<2x8x8xf32>
    "tpu.trace_stop"() : () -> ()
    %84 = vector.shape_cast %83 : vector<2x8x8xf32> to vector<16x8xf32>
    %c1_61 = arith.constant 1 : index
    %c0_62 = arith.constant 0 : index
    %c0_63 = arith.constant 0 : index
    %85 = vector.load %arg7[%c1_61, %c0_62, %c0_63] : memref<4x8x32xf32, #tpu.memory_space<vmem>>, vector<1x8x32xf32>
    %86 = vector.shape_cast %85 : vector<1x8x32xf32> to vector<8x32xf32>
    %cst_64 = arith.constant dense<0.000000e+00> : vector<16x32xf32>
    %87 = tpu.matmul %84, %86, %cst_64 {dimension_numbers = #tpu.dot_dimension_numbers<[1], [0], [0], [1], [0, 0, 1, 1], [], []>} : vector<16x8xf32>, vector<8x32xf32>, vector<16x32xf32> -> vector<16x32xf32>
    %88 = arith.addf %47, %87 : vector<16x32xf32>
    %c2 = arith.constant 2 : index
    %c0_65 = arith.constant 0 : index
    %c0_66 = arith.constant 0 : index
    %89 = vector.load %arg4[%c2, %c0_65, %c0_66] : memref<4x32x8xf32, #tpu.memory_space<vmem>>, vector<1x32x8xf32>
    %90 = vector.shape_cast %89 : vector<1x32x8xf32> to vector<32x8xf32>
    %cst_67 = arith.constant dense<0.000000e+00> : vector<16x8xf32>
    %91 = tpu.matmul %1, %90, %cst_67 {dimension_numbers = #tpu.dot_dimension_numbers<[1], [0], [0], [1], [0, 0, 1, 1], [], []>} : vector<16x32xf32>, vector<32x8xf32>, vector<16x8xf32> -> vector<16x8xf32>
    %c2_68 = arith.constant 2 : index
    %c0_69 = arith.constant 0 : index
    %c0_70 = arith.constant 0 : index
    %92 = vector.load %arg8[%c2_68, %c0_69, %c0_70] : memref<4x1x8xf32, #tpu.memory_space<vmem>>, vector<1x1x8xf32>
    %93 = vector.shape_cast %92 : vector<1x1x8xf32> to vector<1x8xf32>
    %94 = vector.broadcast %93 : vector<1x8xf32> to vector<16x8xf32>
    %95 = arith.addf %91, %94 : vector<16x8xf32>
    %c2_71 = arith.constant 2 : index
    %c0_72 = arith.constant 0 : index
    %c0_73 = arith.constant 0 : index
    %96 = vector.load %arg5[%c2_71, %c0_72, %c0_73] : memref<4x24x8xf32, #tpu.memory_space<vmem>>, vector<1x24x8xf32>
    %97 = vector.shape_cast %96 : vector<1x24x8xf32> to vector<24x8xf32>
    %cst_74 = arith.constant dense<0.000000e+00> : vector<16x8xf32>
    %98 = tpu.matmul %3, %97, %cst_74 {dimension_numbers = #tpu.dot_dimension_numbers<[1], [0], [0], [1], [0, 0, 1, 1], [], []>} : vector<16x24xf32>, vector<24x8xf32>, vector<16x8xf32> -> vector<16x8xf32>
    %c2_75 = arith.constant 2 : index
    %c0_76 = arith.constant 0 : index
    %c0_77 = arith.constant 0 : index
    %99 = vector.load %arg9[%c2_75, %c0_76, %c0_77] : memref<4x1x8xf32, #tpu.memory_space<vmem>>, vector<1x1x8xf32>
    %100 = vector.shape_cast %99 : vector<1x1x8xf32> to vector<1x8xf32>
    %101 = vector.broadcast %100 : vector<1x8xf32> to vector<16x8xf32>
    %102 = arith.addf %98, %101 : vector<16x8xf32>
    %c2_78 = arith.constant 2 : index
    %c0_79 = arith.constant 0 : index
    %c0_80 = arith.constant 0 : index
    %103 = vector.load %arg6[%c2_78, %c0_79, %c0_80] : memref<4x16x8xf32, #tpu.memory_space<vmem>>, vector<1x16x8xf32>
    %104 = vector.shape_cast %103 : vector<1x16x8xf32> to vector<16x8xf32>
    %cst_81 = arith.constant dense<0.000000e+00> : vector<16x8xf32>
    %105 = tpu.matmul %5, %104, %cst_81 {dimension_numbers = #tpu.dot_dimension_numbers<[1], [0], [0], [1], [0, 0, 1, 1], [], []>} : vector<16x16xf32>, vector<16x8xf32>, vector<16x8xf32> -> vector<16x8xf32>
    %c2_82 = arith.constant 2 : index
    %c0_83 = arith.constant 0 : index
    %c0_84 = arith.constant 0 : index
    %106 = vector.load %arg10[%c2_82, %c0_83, %c0_84] : memref<4x1x8xf32, #tpu.memory_space<vmem>>, vector<1x1x8xf32>
    %107 = vector.shape_cast %106 : vector<1x1x8xf32> to vector<1x8xf32>
    %108 = vector.broadcast %107 : vector<1x8xf32> to vector<16x8xf32>
    %109 = arith.addf %105, %108 : vector<16x8xf32>
    %110 = vector.shape_cast %95 : vector<16x8xf32> to vector<2x8x8xf32>
    %111 = vector.shape_cast %102 : vector<16x8xf32> to vector<2x8x8xf32>
    %112 = vector.shape_cast %109 : vector<16x8xf32> to vector<2x8x8xf32>
    "tpu.trace_start"() <{level = 10 : i32, message = "bqd,bkd->bqk"}> : () -> ()
    %cst_85 = arith.constant dense<0.000000e+00> : vector<2x8x8xf32>
    %113 = tpu.matmul %110, %111, %cst_85 {dimension_numbers = #tpu.dot_dimension_numbers<[2], [2], [1], [1], [0, 0, 0, 1, 1, 1], [0], [0]>} : vector<2x8x8xf32>, vector<2x8x8xf32>, vector<2x8x8xf32> -> vector<2x8x8xf32>
    "tpu.trace_stop"() : () -> ()
    %cst_86 = arith.constant dense<0xFF800000> : vector<2x8xf32>
    %114 = vector.multi_reduction <maximumf>, %113, %cst_86 [2] : vector<2x8x8xf32> to vector<2x8xf32>
    %115 = vector.shape_cast %114 : vector<2x8xf32> to vector<2x8x1xf32>
    %116 = vector.broadcast %115 : vector<2x8x1xf32> to vector<2x8x8xf32>
    %117 = arith.subf %113, %116 : vector<2x8x8xf32>
    %118 = math.exp %117 : vector<2x8x8xf32>
    %cst_87 = arith.constant dense<0.000000e+00> : vector<2x8xf32>
    %119 = vector.multi_reduction <add>, %118, %cst_87 [2] : vector<2x8x8xf32> to vector<2x8xf32>
    %120 = vector.shape_cast %119 : vector<2x8xf32> to vector<2x8x1xf32>
    %121 = tpu.reciprocal %120 {approx = true} : vector<2x8x1xf32> -> vector<2x8x1xf32>
    %122 = vector.broadcast %121 : vector<2x8x1xf32> to vector<2x8x8xf32>
    %123 = arith.mulf %118, %122 : vector<2x8x8xf32>
    "tpu.trace_start"() <{level = 10 : i32, message = "bqk,bkd->bqd"}> : () -> ()
    %cst_88 = arith.constant dense<0.000000e+00> : vector<2x8x8xf32>
    %124 = tpu.matmul %123, %112, %cst_88 {dimension_numbers = #tpu.dot_dimension_numbers<[2], [1], [1], [2], [0, 0, 0, 1, 1, 2], [0], [0]>} : vector<2x8x8xf32>, vector<2x8x8xf32>, vector<2x8x8xf32> -> vector<2x8x8xf32>
    "tpu.trace_stop"() : () -> ()
    %125 = vector.shape_cast %124 : vector<2x8x8xf32> to vector<16x8xf32>
    %c2_89 = arith.constant 2 : index
    %c0_90 = arith.constant 0 : index
    %c0_91 = arith.constant 0 : index
    %126 = vector.load %arg7[%c2_89, %c0_90, %c0_91] : memref<4x8x32xf32, #tpu.memory_space<vmem>>, vector<1x8x32xf32>
    %127 = vector.shape_cast %126 : vector<1x8x32xf32> to vector<8x32xf32>
    %cst_92 = arith.constant dense<0.000000e+00> : vector<16x32xf32>
    %128 = tpu.matmul %125, %127, %cst_92 {dimension_numbers = #tpu.dot_dimension_numbers<[1], [0], [0], [1], [0, 0, 1, 1], [], []>} : vector<16x8xf32>, vector<8x32xf32>, vector<16x32xf32> -> vector<16x32xf32>
    %129 = arith.addf %88, %128 : vector<16x32xf32>
    %c3 = arith.constant 3 : index
    %c0_93 = arith.constant 0 : index
    %c0_94 = arith.constant 0 : index
    %130 = vector.load %arg4[%c3, %c0_93, %c0_94] : memref<4x32x8xf32, #tpu.memory_space<vmem>>, vector<1x32x8xf32>
    %131 = vector.shape_cast %130 : vector<1x32x8xf32> to vector<32x8xf32>
    %cst_95 = arith.constant dense<0.000000e+00> : vector<16x8xf32>
    %132 = tpu.matmul %1, %131, %cst_95 {dimension_numbers = #tpu.dot_dimension_numbers<[1], [0], [0], [1], [0, 0, 1, 1], [], []>} : vector<16x32xf32>, vector<32x8xf32>, vector<16x8xf32> -> vector<16x8xf32>
    %c3_96 = arith.constant 3 : index
    %c0_97 = arith.constant 0 : index
    %c0_98 = arith.constant 0 : index
    %133 = vector.load %arg8[%c3_96, %c0_97, %c0_98] : memref<4x1x8xf32, #tpu.memory_space<vmem>>, vector<1x1x8xf32>
    %134 = vector.shape_cast %133 : vector<1x1x8xf32> to vector<1x8xf32>
    %135 = vector.broadcast %134 : vector<1x8xf32> to vector<16x8xf32>
    %136 = arith.addf %132, %135 : vector<16x8xf32>
    %c3_99 = arith.constant 3 : index
    %c0_100 = arith.constant 0 : index
    %c0_101 = arith.constant 0 : index
    %137 = vector.load %arg5[%c3_99, %c0_100, %c0_101] : memref<4x24x8xf32, #tpu.memory_space<vmem>>, vector<1x24x8xf32>
    %138 = vector.shape_cast %137 : vector<1x24x8xf32> to vector<24x8xf32>
    %cst_102 = arith.constant dense<0.000000e+00> : vector<16x8xf32>
    %139 = tpu.matmul %3, %138, %cst_102 {dimension_numbers = #tpu.dot_dimension_numbers<[1], [0], [0], [1], [0, 0, 1, 1], [], []>} : vector<16x24xf32>, vector<24x8xf32>, vector<16x8xf32> -> vector<16x8xf32>
    %c3_103 = arith.constant 3 : index
    %c0_104 = arith.constant 0 : index
    %c0_105 = arith.constant 0 : index
    %140 = vector.load %arg9[%c3_103, %c0_104, %c0_105] : memref<4x1x8xf32, #tpu.memory_space<vmem>>, vector<1x1x8xf32>
    %141 = vector.shape_cast %140 : vector<1x1x8xf32> to vector<1x8xf32>
    %142 = vector.broadcast %141 : vector<1x8xf32> to vector<16x8xf32>
    %143 = arith.addf %139, %142 : vector<16x8xf32>
    %c3_106 = arith.constant 3 : index
    %c0_107 = arith.constant 0 : index
    %c0_108 = arith.constant 0 : index
    %144 = vector.load %arg6[%c3_106, %c0_107, %c0_108] : memref<4x16x8xf32, #tpu.memory_space<vmem>>, vector<1x16x8xf32>
    %145 = vector.shape_cast %144 : vector<1x16x8xf32> to vector<16x8xf32>
    %cst_109 = arith.constant dense<0.000000e+00> : vector<16x8xf32>
    %146 = tpu.matmul %5, %145, %cst_109 {dimension_numbers = #tpu.dot_dimension_numbers<[1], [0], [0], [1], [0, 0, 1, 1], [], []>} : vector<16x16xf32>, vector<16x8xf32>, vector<16x8xf32> -> vector<16x8xf32>
    %c3_110 = arith.constant 3 : index
    %c0_111 = arith.constant 0 : index
    %c0_112 = arith.constant 0 : index
    %147 = vector.load %arg10[%c3_110, %c0_111, %c0_112] : memref<4x1x8xf32, #tpu.memory_space<vmem>>, vector<1x1x8xf32>
    %148 = vector.shape_cast %147 : vector<1x1x8xf32> to vector<1x8xf32>
    %149 = vector.broadcast %148 : vector<1x8xf32> to vector<16x8xf32>
    %150 = arith.addf %146, %149 : vector<16x8xf32>
    %151 = vector.shape_cast %136 : vector<16x8xf32> to vector<2x8x8xf32>
    %152 = vector.shape_cast %143 : vector<16x8xf32> to vector<2x8x8xf32>
    %153 = vector.shape_cast %150 : vector<16x8xf32> to vector<2x8x8xf32>
    "tpu.trace_start"() <{level = 10 : i32, message = "bqd,bkd->bqk"}> : () -> ()
    %cst_113 = arith.constant dense<0.000000e+00> : vector<2x8x8xf32>
    %154 = tpu.matmul %151, %152, %cst_113 {dimension_numbers = #tpu.dot_dimension_numbers<[2], [2], [1], [1], [0, 0, 0, 1, 1, 1], [0], [0]>} : vector<2x8x8xf32>, vector<2x8x8xf32>, vector<2x8x8xf32> -> vector<2x8x8xf32>
    "tpu.trace_stop"() : () -> ()
    %cst_114 = arith.constant dense<0xFF800000> : vector<2x8xf32>
    %155 = vector.multi_reduction <maximumf>, %154, %cst_114 [2] : vector<2x8x8xf32> to vector<2x8xf32>
    %156 = vector.shape_cast %155 : vector<2x8xf32> to vector<2x8x1xf32>
    %157 = vector.broadcast %156 : vector<2x8x1xf32> to vector<2x8x8xf32>
    %158 = arith.subf %154, %157 : vector<2x8x8xf32>
    %159 = math.exp %158 : vector<2x8x8xf32>
    %cst_115 = arith.constant dense<0.000000e+00> : vector<2x8xf32>
    %160 = vector.multi_reduction <add>, %159, %cst_115 [2] : vector<2x8x8xf32> to vector<2x8xf32>
    %161 = vector.shape_cast %160 : vector<2x8xf32> to vector<2x8x1xf32>
    %162 = tpu.reciprocal %161 {approx = true} : vector<2x8x1xf32> -> vector<2x8x1xf32>
    %163 = vector.broadcast %162 : vector<2x8x1xf32> to vector<2x8x8xf32>
    %164 = arith.mulf %159, %163 : vector<2x8x8xf32>
    "tpu.trace_start"() <{level = 10 : i32, message = "bqk,bkd->bqd"}> : () -> ()
    %cst_116 = arith.constant dense<0.000000e+00> : vector<2x8x8xf32>
    %165 = tpu.matmul %164, %153, %cst_116 {dimension_numbers = #tpu.dot_dimension_numbers<[2], [1], [1], [2], [0, 0, 0, 1, 1, 2], [0], [0]>} : vector<2x8x8xf32>, vector<2x8x8xf32>, vector<2x8x8xf32> -> vector<2x8x8xf32>
    "tpu.trace_stop"() : () -> ()
    %166 = vector.shape_cast %165 : vector<2x8x8xf32> to vector<16x8xf32>
    %c3_117 = arith.constant 3 : index
    %c0_118 = arith.constant 0 : index
    %c0_119 = arith.constant 0 : index
    %167 = vector.load %arg7[%c3_117, %c0_118, %c0_119] : memref<4x8x32xf32, #tpu.memory_space<vmem>>, vector<1x8x32xf32>
    %168 = vector.shape_cast %167 : vector<1x8x32xf32> to vector<8x32xf32>
    %cst_120 = arith.constant dense<0.000000e+00> : vector<16x32xf32>
    %169 = tpu.matmul %166, %168, %cst_120 {dimension_numbers = #tpu.dot_dimension_numbers<[1], [0], [0], [1], [0, 0, 1, 1], [], []>} : vector<16x8xf32>, vector<8x32xf32>, vector<16x32xf32> -> vector<16x32xf32>
    %170 = arith.addf %129, %169 : vector<16x32xf32>
    %c0_121 = arith.constant 0 : index
    %c0_122 = arith.constant 0 : index
    %171 = vector.load %arg11[%c0_121, %c0_122] : memref<1x32xf32, #tpu.memory_space<vmem>>, vector<1x32xf32>
    %172 = vector.broadcast %171 : vector<1x32xf32> to vector<16x32xf32>
    %173 = arith.addf %170, %172 : vector<16x32xf32>
    %174 = arith.addf %1, %173 : vector<16x32xf32>
    %cst_123 = arith.constant dense<0.000000e+00> : vector<16xf32>
    %175 = vector.multi_reduction <add>, %174, %cst_123 [1] : vector<16x32xf32> to vector<16xf32>
    %176 = vector.shape_cast %175 : vector<16xf32> to vector<16x1xf32>
    %cst_124 = arith.constant 3.200000e+01 : f32
    %177 = vector.broadcast %cst_124 : f32 to vector<16x1xf32>
    %178 = arith.divf %176, %177 : vector<16x1xf32>
    %179 = vector.broadcast %178 : vector<16x1xf32> to vector<16x32xf32>
    %180 = arith.subf %174, %179 : vector<16x32xf32>
    %181 = arith.mulf %180, %180 : vector<16x32xf32>
    %cst_125 = arith.constant dense<0.000000e+00> : vector<16xf32>
    %182 = vector.multi_reduction <add>, %181, %cst_125 [1] : vector<16x32xf32> to vector<16xf32>
    %183 = vector.shape_cast %182 : vector<16xf32> to vector<16x1xf32>
    %cst_126 = arith.constant 3.200000e+01 : f32
    %184 = vector.broadcast %cst_126 : f32 to vector<16x1xf32>
    %185 = arith.divf %183, %184 : vector<16x1xf32>
    %cst_127 = arith.constant 9.99999974E-6 : f32
    %186 = vector.broadcast %cst_127 : f32 to vector<16x1xf32>
    %187 = arith.addf %185, %186 : vector<16x1xf32>
    %188 = math.rsqrt %187 : vector<16x1xf32>
    %189 = vector.broadcast %188 : vector<16x1xf32> to vector<16x32xf32>
    %190 = arith.mulf %180, %189 : vector<16x32xf32>
    %c0_128 = arith.constant 0 : index
    %c0_129 = arith.constant 0 : index
    %191 = vector.load %arg12[%c0_128, %c0_129] : memref<1x32xf32, #tpu.memory_space<vmem>>, vector<1x32xf32>
    %192 = vector.broadcast %191 : vector<1x32xf32> to vector<16x32xf32>
    %193 = arith.mulf %190, %192 : vector<16x32xf32>
    %c0_130 = arith.constant 0 : index
    %c0_131 = arith.constant 0 : index
    %194 = vector.load %arg13[%c0_130, %c0_131] : memref<1x32xf32, #tpu.memory_space<vmem>>, vector<1x32xf32>
    %195 = vector.broadcast %194 : vector<1x32xf32> to vector<16x32xf32>
    %196 = arith.addf %193, %195 : vector<16x32xf32>
    %c0_132 = arith.constant 0 : index
    %c0_133 = arith.constant 0 : index
    %197 = vector.load %arg14[%c0_132, %c0_133] : memref<16x32xf32, #tpu.memory_space<vmem>>, vector<16x32xf32>
    tpu.vector_store %arg14[%c0_132, %c0_133], %196 {strides = array<i32>} : memref<16x32xf32, #tpu.memory_space<vmem>>, vector<16x32xf32>,
    return
  }
  func.func @transform_0(%arg0: i32) -> (i32, i32, i32) {
    %c0_i32 = arith.constant 0 : i32
    %c0_i32_0 = arith.constant 0 : i32
    %c0_i32_1 = arith.constant 0 : i32
    return %arg0, %c0_i32, %c0_i32_0 : i32, i32, i32
  }
  func.func @transform_1(%arg0: i32) -> (i32, i32, i32) {
    %c0_i32 = arith.constant 0 : i32
    %c0_i32_0 = arith.constant 0 : i32
    %c0_i32_1 = arith.constant 0 : i32
    return %arg0, %c0_i32, %c0_i32_0 : i32, i32, i32
  }
  func.func @transform_2(%arg0: i32) -> (i32, i32, i32) {
    %c0_i32 = arith.constant 0 : i32
    %c0_i32_0 = arith.constant 0 : i32
    %c0_i32_1 = arith.constant 0 : i32
    return %arg0, %c0_i32, %c0_i32_0 : i32, i32, i32
  }
  func.func @transform_3(%arg0: i32) -> (i32, i32, i32) {
    %c0_i32 = arith.constant 0 : i32
    %c0_i32_0 = arith.constant 0 : i32
    %c0_i32_1 = arith.constant 0 : i32
    %c0_i32_2 = arith.constant 0 : i32
    return %c0_i32, %c0_i32_0, %c0_i32_1 : i32, i32, i32
  }
  func.func @transform_4(%arg0: i32) -> (i32, i32, i32) {
    %c0_i32 = arith.constant 0 : i32
    %c0_i32_0 = arith.constant 0 : i32
    %c0_i32_1 = arith.constant 0 : i32
    %c0_i32_2 = arith.constant 0 : i32
    return %c0_i32, %c0_i32_0, %c0_i32_1 : i32, i32, i32
  }
  func.func @transform_5(%arg0: i32) -> (i32, i32, i32) {
    %c0_i32 = arith.constant 0 : i32
    %c0_i32_0 = arith.constant 0 : i32
    %c0_i32_1 = arith.constant 0 : i32
    %c0_i32_2 = arith.constant 0 : i32
    return %c0_i32, %c0_i32_0, %c0_i32_1 : i32, i32, i32
  }
  func.func @transform_6(%arg0: i32) -> (i32, i32, i32) {
    %c0_i32 = arith.constant 0 : i32
    %c0_i32_0 = arith.constant 0 : i32
    %c0_i32_1 = arith.constant 0 : i32
    %c0_i32_2 = arith.constant 0 : i32
    return %c0_i32, %c0_i32_0, %c0_i32_1 : i32, i32, i32
  }
  func.func @transform_7(%arg0: i32) -> (i32, i32, i32) {
    %c0_i32 = arith.constant 0 : i32
    %c0_i32_0 = arith.constant 0 : i32
    %c0_i32_1 = arith.constant 0 : i32
    %c0_i32_2 = arith.constant 0 : i32
    return %c0_i32, %c0_i32_0, %c0_i32_1 : i32, i32, i32
  }
  func.func @transform_8(%arg0: i32) -> (i32, i32, i32) {
    %c0_i32 = arith.constant 0 : i32
    %c0_i32_0 = arith.constant 0 : i32
    %c0_i32_1 = arith.constant 0 : i32
    %c0_i32_2 = arith.constant 0 : i32
    return %c0_i32, %c0_i32_0, %c0_i32_1 : i32, i32, i32
  }
  func.func @transform_9(%arg0: i32) -> (i32, i32, i32) {
    %c0_i32 = arith.constant 0 : i32
    %c0_i32_0 = arith.constant 0 : i32
    %c0_i32_1 = arith.constant 0 : i32
    %c0_i32_2 = arith.constant 0 : i32
    return %c0_i32, %c0_i32_0, %c0_i32_1 : i32, i32, i32
  }
  func.func @transform_10(%arg0: i32) -> (i32, i32) {
    %c0_i32 = arith.constant 0 : i32
    %c0_i32_0 = arith.constant 0 : i32
    %c0_i32_1 = arith.constant 0 : i32
    return %c0_i32, %c0_i32_0 : i32, i32
  }
  func.func @transform_11(%arg0: i32) -> (i32, i32) {
    %c0_i32 = arith.constant 0 : i32
    %c0_i32_0 = arith.constant 0 : i32
    %c0_i32_1 = arith.constant 0 : i32
    return %c0_i32, %c0_i32_0 : i32, i32
  }
  func.func @transform_12(%arg0: i32) -> (i32, i32) {
    %c0_i32 = arith.constant 0 : i32
    %c0_i32_0 = arith.constant 0 : i32
    %c0_i32_1 = arith.constant 0 : i32
    return %c0_i32, %c0_i32_0 : i32, i32
  }
  func.func @transform_13(%arg0: i32) -> (i32, i32) {
    %c0_i32 = arith.constant 0 : i32
    %c0_i32_0 = arith.constant 0 : i32
    return %arg0, %c0_i32 : i32, i32
  }
}

</mosaic_0001>

<llo_original>
// kernel: tpu_custom_call.1
$region0: #{tpu_custom_call.1}
  #allocation0 [shape = 'u32[]', space=smem, size = 0x4, offset = 0x4, fixed_abs, tag = 'smem constant byte address 0x4 - core index']
  #allocation1 [shape = 'u32[72,128]{1,0:T(1,128)}', space=vmem, size = 0x9000, scoped, tag = 'internal scratch']
  %s0 = inlined_call_operand.vmem [shape: f32[2,8,32], index: 0, kind: input, shape index: {}]
  %s1 = inlined_call_operand.vmem [shape: f32[2,8,24], index: 1, kind: input, shape index: {}]
  %s2 = inlined_call_operand.vmem [shape: f32[2,8,16], index: 2, kind: input, shape index: {}]
  %s3 = inlined_call_operand.vmem [shape: f32[4,32,8], index: 3, kind: input, shape index: {}]
  %s4 = inlined_call_operand.vmem [shape: f32[4,24,8], index: 4, kind: input, shape index: {}]
  %s5 = inlined_call_operand.vmem [shape: f32[4,16,8], index: 5, kind: input, shape index: {}]
  %s6 = inlined_call_operand.vmem [shape: f32[4,8,32], index: 6, kind: input, shape index: {}]
  %s7 = inlined_call_operand.vmem [shape: f32[4,1,8], index: 7, kind: input, shape index: {}]
  %s8 = inlined_call_operand.vmem [shape: f32[4,1,8], index: 8, kind: input, shape index: {}]
  %s9 = inlined_call_operand.vmem [shape: f32[4,1,8], index: 9, kind: input, shape index: {}]
  %s10 = inlined_call_operand.vmem [shape: f32[1,32], index: 10, kind: input, shape index: {}]
  %s11 = inlined_call_operand.vmem [shape: f32[1,32], index: 11, kind: input, shape index: {}]
  %s12 = inlined_call_operand.vmem [shape: f32[1,32], index: 12, kind: input, shape index: {}]
  %s13 = inlined_call_operand.hbm [shape: f32[16,32], index: 13, kind: output, shape index: {}]
  %s14 = sld [smem:[#allocation0]]
  $region62: #{tpu_custom_call.1} parent=0
    _
  %s16 = ssub.s32 1, %s14
  %s17 = scalar_select 0, %s16, %s14
  $region1: #{tpu_custom_call.1} parent=0
    #allocation2 [shape = 'u8[8192]{0}', space=vmem, size = 0x2000, scoped, tag = 'output window, operand 0, single buffered']
    #allocation3 [shape = 's32[1]{0}', space=sflag, size = 0x4, scoped, tag = 'scoped memory for tpu_custom_call.1']
    %18 = vsyncpa [#allocation3], 0
    // Predicated region
    $region2: #{tpu_custom_call.1} parent=1 // pred_check
      _
    $region3: #{tpu_custom_call.1} parent=1 // pred_check_branch
      %20 = sbr.rel (0) target = $region5
    $region4: #{tpu_custom_call.1} parent=1 // pred_region
      _
    $region5: #{tpu_custom_call.1} parent=1 // pred_fallthru
      _
    // Predicated region
    $region6: #{tpu_custom_call.1} parent=1 // pred_check
      _
    $region7: #{tpu_custom_call.1} parent=1 // pred_check_branch
      %22 = sbr.rel (0) target = $region9
    $region8: #{tpu_custom_call.1} parent=1 // pred_region
      _
    $region9: #{tpu_custom_call.1} parent=1 // pred_fallthru
      _
    // Predicated region
    $region10: #{tpu_custom_call.1} parent=1 // pred_check
      _
    $region11: #{tpu_custom_call.1} parent=1 // pred_check_branch
      %24 = sbr.rel (0) target = $region13
    $region12: #{tpu_custom_call.1} parent=1 // pred_region
      _
    $region13: #{tpu_custom_call.1} parent=1 // pred_fallthru
      _
    // Predicated region
    $region14: #{tpu_custom_call.1} parent=1 // pred_check
      _
    $region15: #{tpu_custom_call.1} parent=1 // pred_check_branch
      %26 = sbr.rel (0) target = $region17
    $region16: #{tpu_custom_call.1} parent=1 // pred_region
      _
    $region17: #{tpu_custom_call.1} parent=1 // pred_fallthru
      _
    // Predicated region
    $region18: #{tpu_custom_call.1} parent=1 // pred_check
      _
    $region19: #{tpu_custom_call.1} parent=1 // pred_check_branch
      %28 = sbr.rel (0) target = $region21
    $region20: #{tpu_custom_call.1} parent=1 // pred_region
      _
    $region21: #{tpu_custom_call.1} parent=1 // pred_fallthru
      _
    // Predicated region
    $region22: #{tpu_custom_call.1} parent=1 // pred_check
      _
    $region23: #{tpu_custom_call.1} parent=1 // pred_check_branch
      %30 = sbr.rel (0) target = $region25
    $region24: #{tpu_custom_call.1} parent=1 // pred_region
      _
    $region25: #{tpu_custom_call.1} parent=1 // pred_fallthru
      _
    // Predicated region
    $region26: #{tpu_custom_call.1} parent=1 // pred_check
      _
    $region27: #{tpu_custom_call.1} parent=1 // pred_check_branch
      %32 = sbr.rel (0) target = $region29
    $region28: #{tpu_custom_call.1} parent=1 // pred_region
      _
    $region29: #{tpu_custom_call.1} parent=1 // pred_fallthru
      _
    // Predicated region
    $region30: #{tpu_custom_call.1} parent=1 // pred_check
      _
    $region31: #{tpu_custom_call.1} parent=1 // pred_check_branch
      %34 = sbr.rel (0) target = $region33
    $region32: #{tpu_custom_call.1} parent=1 // pred_region
      _
    $region33: #{tpu_custom_call.1} parent=1 // pred_fallthru
      _
    // Predicated region
    $region34: #{tpu_custom_call.1} parent=1 // pred_check
      _
    $region35: #{tpu_custom_call.1} parent=1 // pred_check_branch
      %36 = sbr.rel (0) target = $region37
    $region36: #{tpu_custom_call.1} parent=1 // pred_region
      _
    $region37: #{tpu_custom_call.1} parent=1 // pred_fallthru
      _
    // Predicated region
    $region38: #{tpu_custom_call.1} parent=1 // pred_check
      _
    $region39: #{tpu_custom_call.1} parent=1 // pred_check_branch
      %38 = sbr.rel (0) target = $region41
    $region40: #{tpu_custom_call.1} parent=1 // pred_region
      _
    $region41: #{tpu_custom_call.1} parent=1 // pred_fallthru
      _
    // Predicated region
    $region42: #{tpu_custom_call.1} parent=1 // pred_check
      _
    $region43: #{tpu_custom_call.1} parent=1 // pred_check_branch
      %40 = sbr.rel (0) target = $region45
    $region44: #{tpu_custom_call.1} parent=1 // pred_region
      _
    $region45: #{tpu_custom_call.1} parent=1 // pred_fallthru
      _
    // Predicated region
    $region46: #{tpu_custom_call.1} parent=1 // pred_check
      _
    $region47: #{tpu_custom_call.1} parent=1 // pred_check_branch
      %42 = sbr.rel (0) target = $region49
    $region48: #{tpu_custom_call.1} parent=1 // pred_region
      _
    $region49: #{tpu_custom_call.1} parent=1 // pred_fallthru
      _
    // Predicated region
    $region50: #{tpu_custom_call.1} parent=1 // pred_check
      _
    $region51: #{tpu_custom_call.1} parent=1 // pred_check_branch
      %44 = sbr.rel (0) target = $region53
    $region52: #{tpu_custom_call.1} parent=1 // pred_region
      _
    $region53: #{tpu_custom_call.1} parent=1 // pred_fallthru
      _
    %v45 = vld [vmem:[%s0] sm:$0xff]
    %v46 = vld [vmem:[%s0 + $0x8] sm:$0xff]
    %v47 = vld [vmem:[%s1] sm:$0xff]
    %v48 = vld [vmem:[%s1 + $0x8] sm:$0xff]
    %v49 = vld [vmem:[%s2] sm:$0xff]
    %v50 = vld [vmem:[%s2 + $0x8] sm:$0xff]
    %v51 = vld [vmem:[%s3] sm:$0xff]
    %v52 = vld [vmem:[%s3 + $0x8] sm:$0xff]
    %v53 = vld [vmem:[%s3 + $0x10] sm:$0xff]
    %v54 = vld [vmem:[%s3 + $0x18] sm:$0xff]
    %v55 = vld [vmem:[%s7] sm:$0x1]
    %v57 = vperm.slane %v55, 0
    %vm59 = vcmask 261120
    %v61 = vsel %vm59, %v45, 0
    %v64 = vsel %vm59, %v46, 0
    %66 = vmatpush.msra.mxu0 0.0
    %67 = vmatpush.msra.mxu0 0.0
    %68 = vmatpush.msra.mxu0 0.0
    %69 = vmatpush.msra.mxu0 0.0
    %70 = vmatpush.msra.mxu0 0.0
    %71 = vmatpush.msra.mxu0 0.0
    %72 = vmatpush.msra.mxu0 0.0
    %73 = vmatpush.msra.mxu0 0.0
    %74 = vmatpush.msra.mxu0 0.0
    %75 = vmatpush.msra.mxu0 0.0
    %76 = vmatpush.msra.mxu0 0.0
    %77 = vmatpush.msra.mxu0 0.0
    %78 = vmatpush.msra.mxu0 %v54
    %79 = vmatpush.msra.mxu0 %v53
    %80 = vmatpush.msra.mxu0 %v52
    %81 = vmatpush.msra.mxu0 %v51
    %82 = vmatmul.f32.gmra.mxu0 %v61
    %v83 = vpop.f32.mrf.mxu0
    %v84 = vadd.f32 %v57, %v83
    %85 = vmatmul.f32.gmra.mxu0 %v64
    %v86 = vpop.f32.mrf.mxu0
    %v87 = vadd.f32 %v57, %v86
    %88 = vdwg.mxu0
    %v89 = vld [vmem:[%s4] sm:$0xff]
    %v90 = vld [vmem:[%s4 + $0x8] sm:$0xff]
    %v91 = vld [vmem:[%s4 + $0x10] sm:$0xff]
    %v92 = vld [vmem:[%s8] sm:$0x1]
    %v94 = vperm.slane %v92, 0
    %vm96 = vcmask 195584
    %v98 = vsel %vm96, %v47, 0
    %v101 = vsel %vm96, %v48, 0
    %103 = vmatpush.msra.mxu0 0.0
    %104 = vmatpush.msra.mxu0 0.0
    %105 = vmatpush.msra.mxu0 0.0
    %106 = vmatpush.msra.mxu0 0.0
    %107 = vmatpush.msra.mxu0 0.0
    %108 = vmatpush.msra.mxu0 0.0
    %109 = vmatpush.msra.mxu0 0.0
    %110 = vmatpush.msra.mxu0 0.0
    %111 = vmatpush.msra.mxu0 0.0
    %112 = vmatpush.msra.mxu0 0.0
    %113 = vmatpush.msra.mxu0 0.0
    %114 = vmatpush.msra.mxu0 0.0
    %115 = vmatpush.msra.mxu0 0.0
    %116 = vmatpush.msra.mxu0 %v91
    %117 = vmatpush.msra.mxu0 %v90
    %118 = vmatpush.msra.mxu0 %v89
    %119 = vmatmul.f32.gmra.mxu0 %v98
    %v120 = vpop.f32.mrf.mxu0
    %v121 = vadd.f32 %v94, %v120
    %122 = vmatmul.f32.gmra.mxu0 %v101
    %v123 = vpop.f32.mrf.mxu0
    %v124 = vadd.f32 %v94, %v123
    %125 = vdwg.mxu0
    %v126 = vld [vmem:[%s5] sm:$0xff]
    %v127 = vld [vmem:[%s5 + $0x8] sm:$0xff]
    %v128 = vld [vmem:[%s9] sm:$0x1]
    %v130 = vperm.slane %v128, 0
    %vm132 = vcmask 130048
    %v134 = vsel %vm132, %v49, 0
    %v137 = vsel %vm132, %v50, 0
    %139 = vmatpush.msra.mxu0 0.0
    %140 = vmatpush.msra.mxu0 0.0
    %141 = vmatpush.msra.mxu0 0.0
    %142 = vmatpush.msra.mxu0 0.0
    %143 = vmatpush.msra.mxu0 0.0
    %144 = vmatpush.msra.mxu0 0.0
    %145 = vmatpush.msra.mxu0 0.0
    %146 = vmatpush.msra.mxu0 0.0
    %147 = vmatpush.msra.mxu0 0.0
    %148 = vmatpush.msra.mxu0 0.0
    %149 = vmatpush.msra.mxu0 0.0
    %150 = vmatpush.msra.mxu0 0.0
    %151 = vmatpush.msra.mxu0 0.0
    %152 = vmatpush.msra.mxu0 0.0
    %153 = vmatpush.msra.mxu0 %v127
    %154 = vmatpush.msra.mxu0 %v126
    %155 = vmatmul.f32.gmra.mxu0 %v134
    %v156 = vpop.f32.mrf.mxu0
    %v157 = vadd.f32 %v130, %v156
    %158 = vmatmul.f32.gmra.mxu0 %v137
    %v159 = vpop.f32.mrf.mxu0
    %v160 = vadd.f32 %v130, %v159
    %161 = vdwg.mxu0
    %vm162 = vcmask 64512
    %v164 = vsel %vm162, %v84, 0
    %v167 = vsel %vm162, %v121, 0
    %169 = vmatpush.xpose.msra.mxu0 0.0
    %170 = vmatpush.xpose.msra.mxu0 0.0
    %171 = vmatpush.xpose.msra.mxu0 0.0
    %172 = vmatpush.xpose.msra.mxu0 0.0
    %173 = vmatpush.xpose.msra.mxu0 0.0
    %174 = vmatpush.xpose.msra.mxu0 0.0
    %175 = vmatpush.xpose.msra.mxu0 0.0
    %176 = vmatpush.xpose.msra.mxu0 0.0
    %177 = vmatpush.xpose.msra.mxu0 0.0
    %178 = vmatpush.xpose.msra.mxu0 0.0
    %179 = vmatpush.xpose.msra.mxu0 0.0
    %180 = vmatpush.xpose.msra.mxu0 0.0
    %181 = vmatpush.xpose.msra.mxu0 0.0
    %182 = vmatpush.xpose.msra.mxu0 0.0
    %183 = vmatpush.xpose.msra.mxu0 0.0
    %184 = vmatpush.xpose.msra.mxu0 %v167
    %185 = vmatmul.f32.gmra.mxu0 %v164
    %v186 = vpop.f32.mrf.mxu0
    %v187 = vadd.f32 0.0, %v186
    %188 = vdwg.mxu0
    %v190 = vsel %vm162, %v87, 0
    %v193 = vsel %vm162, %v124, 0
    %195 = vmatpush.xpose.msra.mxu0 0.0
    %196 = vmatpush.xpose.msra.mxu0 0.0
    %197 = vmatpush.xpose.msra.mxu0 0.0
    %198 = vmatpush.xpose.msra.mxu0 0.0
    %199 = vmatpush.xpose.msra.mxu0 0.0
    %200 = vmatpush.xpose.msra.mxu0 0.0
    %201 = vmatpush.xpose.msra.mxu0 0.0
    %202 = vmatpush.xpose.msra.mxu0 0.0
    %203 = vmatpush.xpose.msra.mxu0 0.0
    %204 = vmatpush.xpose.msra.mxu0 0.0
    %205 = vmatpush.xpose.msra.mxu0 0.0
    %206 = vmatpush.xpose.msra.mxu0 0.0
    %207 = vmatpush.xpose.msra.mxu0 0.0
    %208 = vmatpush.xpose.msra.mxu0 0.0
    %209 = vmatpush.xpose.msra.mxu0 0.0
    %210 = vmatpush.xpose.msra.mxu0 %v193
    %211 = vmatmul.f32.gmra.mxu0 %v190
    %v212 = vpop.f32.mrf.mxu0
    %v213 = vadd.f32 0.0, %v212
    %214 = vdwg.mxu0
    %v215 = vsel %vm162, %v187, -inf
    %216 = vmax.xlane.f32.xlu0 %v215
    %v217 = vpop.xlane.xlu0 %216
    %v218 = vsel %vm162, %v213, -inf
    %219 = vmax.xlane.f32.xlu0 %v218
    %v220 = vpop.xlane.xlu0 %219
    %v221 = vsub.f32 %v187, %v217
    %v222 = vsub.f32 %v213, %v220
    %v223 = vmul.f32 %v221, 1.442695
    %v224 = vpow.pop %v223
    %v225 = vmul.f32 %v222, 1.442695
    %v226 = vpow.pop %v225
    %v227 = vsel %vm162, %v224, 0.0
    %228 = vadd.xlane.f32.xlu0 %v227
    %v229 = vpop.xlane.xlu0 %228
    %v230 = vsel %vm162, %v226, 0.0
    %231 = vadd.xlane.f32.xlu0 %v230
    %v232 = vpop.xlane.xlu0 %231
    %v233 = vrcp.pop %v229
    %v234 = vrcp.pop %v232
    %v235 = vmul.f32 %v224, %v233
    %v236 = vmul.f32 %v226, %v234
    %v238 = vsel %vm162, %v235, 0
    %240 = vmatpush.msra.mxu0 0.0
    %241 = vmatpush.msra.mxu0 0.0
    %242 = vmatpush.msra.mxu0 0.0
    %243 = vmatpush.msra.mxu0 0.0
    %244 = vmatpush.msra.mxu0 0.0
    %245 = vmatpush.msra.mxu0 0.0
    %246 = vmatpush.msra.mxu0 0.0
    %247 = vmatpush.msra.mxu0 0.0
    %248 = vmatpush.msra.mxu0 0.0
    %249 = vmatpush.msra.mxu0 0.0
    %250 = vmatpush.msra.mxu0 0.0
    %251 = vmatpush.msra.mxu0 0.0
    %252 = vmatpush.msra.mxu0 0.0
    %253 = vmatpush.msra.mxu0 0.0
    %254 = vmatpush.msra.mxu0 0.0
    %255 = vmatpush.msra.mxu0 %v157
    %256 = vmatmul.f32.gmra.mxu0 %v238
    %v257 = vpop.f32.mrf.mxu0
    %v258 = vadd.f32 0.0, %v257
    %259 = vdwg.mxu0
    %v261 = vsel %vm162, %v236, 0
    %263 = vmatpush.msra.mxu0 0.0
    %264 = vmatpush.msra.mxu0 0.0
    %265 = vmatpush.msra.mxu0 0.0
    %266 = vmatpush.msra.mxu0 0.0
    %267 = vmatpush.msra.mxu0 0.0
    %268 = vmatpush.msra.mxu0 0.0
    %269 = vmatpush.msra.mxu0 0.0
    %270 = vmatpush.msra.mxu0 0.0
    %271 = vmatpush.msra.mxu0 0.0
    %272 = vmatpush.msra.mxu0 0.0
    %273 = vmatpush.msra.mxu0 0.0
    %274 = vmatpush.msra.mxu0 0.0
    %275 = vmatpush.msra.mxu0 0.0
    %276 = vmatpush.msra.mxu0 0.0
    %277 = vmatpush.msra.mxu0 0.0
    %278 = vmatpush.msra.mxu0 %v160
    %279 = vmatmul.f32.gmra.mxu0 %v261
    %v280 = vpop.f32.mrf.mxu0
    %v281 = vadd.f32 0.0, %v280
    %282 = vdwg.mxu0
    %v283 = vld [vmem:[%s6] sm:$0xff]
    %s284 = scalar_lea.vmem %s3, 32
    %v285 = vld [vmem:[%s284] sm:$0xff]
    %v286 = vld [vmem:[%s284 + $0x8] sm:$0xff]
    %v287 = vld [vmem:[%s284 + $0x10] sm:$0xff]
    %v288 = vld [vmem:[%s284 + $0x18] sm:$0xff]
    %s289 = scalar_lea.vmem %s7, 1
    %v290 = vld [vmem:[%s289] sm:$0x1]
    %v292 = vperm.slane %v290, 0
    %294 = vmatpush.msra.mxu0 0.0
    %295 = vmatpush.msra.mxu0 0.0
    %296 = vmatpush.msra.mxu0 0.0
    %297 = vmatpush.msra.mxu0 0.0
    %298 = vmatpush.msra.mxu0 0.0
    %299 = vmatpush.msra.mxu0 0.0
    %300 = vmatpush.msra.mxu0 0.0
    %301 = vmatpush.msra.mxu0 0.0
    %302 = vmatpush.msra.mxu0 0.0
    %303 = vmatpush.msra.mxu0 0.0
    %304 = vmatpush.msra.mxu0 0.0
    %305 = vmatpush.msra.mxu0 0.0
    %306 = vmatpush.msra.mxu0 %v288
    %307 = vmatpush.msra.mxu0 %v287
    %308 = vmatpush.msra.mxu0 %v286
    %309 = vmatpush.msra.mxu0 %v285
    %310 = vmatmul.f32.gmra.mxu0 %v61
    %v311 = vpop.f32.mrf.mxu0
    %v312 = vadd.f32 %v292, %v311
    %313 = vmatmul.f32.gmra.mxu0 %v64
    %v314 = vpop.f32.mrf.mxu0
    %v315 = vadd.f32 %v292, %v314
    %316 = vdwg.mxu0
    %s317 = scalar_lea.vmem %s4, 24
    %v318 = vld [vmem:[%s317] sm:$0xff]
    %v319 = vld [vmem:[%s317 + $0x8] sm:$0xff]
    %v320 = vld [vmem:[%s317 + $0x10] sm:$0xff]
    %s321 = scalar_lea.vmem %s8, 1
    %v322 = vld [vmem:[%s321] sm:$0x1]
    %v324 = vperm.slane %v322, 0
    %326 = vmatpush.msra.mxu0 0.0
    %327 = vmatpush.msra.mxu0 0.0
    %328 = vmatpush.msra.mxu0 0.0
    %329 = vmatpush.msra.mxu0 0.0
    %330 = vmatpush.msra.mxu0 0.0
    %331 = vmatpush.msra.mxu0 0.0
    %332 = vmatpush.msra.mxu0 0.0
    %333 = vmatpush.msra.mxu0 0.0
    %334 = vmatpush.msra.mxu0 0.0
    %335 = vmatpush.msra.mxu0 0.0
    %336 = vmatpush.msra.mxu0 0.0
    %337 = vmatpush.msra.mxu0 0.0
    %338 = vmatpush.msra.mxu0 0.0
    %339 = vmatpush.msra.mxu0 %v320
    %340 = vmatpush.msra.mxu0 %v319
    %341 = vmatpush.msra.mxu0 %v318
    %342 = vmatmul.f32.gmra.mxu0 %v98
    %v343 = vpop.f32.mrf.mxu0
    %v344 = vadd.f32 %v324, %v343
    %345 = vmatmul.f32.gmra.mxu0 %v101
    %v346 = vpop.f32.mrf.mxu0
    %v347 = vadd.f32 %v324, %v346
    %348 = vdwg.mxu0
    %s349 = scalar_lea.vmem %s5, 16
    %v350 = vld [vmem:[%s349] sm:$0xff]
    %v351 = vld [vmem:[%s349 + $0x8] sm:$0xff]
    %s352 = scalar_lea.vmem %s9, 1
    %v353 = vld [vmem:[%s352] sm:$0x1]
    %v355 = vperm.slane %v353, 0
    %357 = vmatpush.msra.mxu0 0.0
    %358 = vmatpush.msra.mxu0 0.0
    %359 = vmatpush.msra.mxu0 0.0
    %360 = vmatpush.msra.mxu0 0.0
    %361 = vmatpush.msra.mxu0 0.0
    %362 = vmatpush.msra.mxu0 0.0
    %363 = vmatpush.msra.mxu0 0.0
    %364 = vmatpush.msra.mxu0 0.0
    %365 = vmatpush.msra.mxu0 0.0
    %366 = vmatpush.msra.mxu0 0.0
    %367 = vmatpush.msra.mxu0 0.0
    %368 = vmatpush.msra.mxu0 0.0
    %369 = vmatpush.msra.mxu0 0.0
    %370 = vmatpush.msra.mxu0 0.0
    %371 = vmatpush.msra.mxu0 %v351
    %372 = vmatpush.msra.mxu0 %v350
    %373 = vmatmul.f32.gmra.mxu0 %v134
    %v374 = vpop.f32.mrf.mxu0
    %v375 = vadd.f32 %v355, %v374
    %376 = vmatmul.f32.gmra.mxu0 %v137
    %v377 = vpop.f32.mrf.mxu0
    %v378 = vadd.f32 %v355, %v377
    %379 = vdwg.mxu0
    %v381 = vsel %vm162, %v312, 0
    %v384 = vsel %vm162, %v344, 0
    %386 = vmatpush.xpose.msra.mxu0 0.0
    %387 = vmatpush.xpose.msra.mxu0 0.0
    %388 = vmatpush.xpose.msra.mxu0 0.0
    %389 = vmatpush.xpose.msra.mxu0 0.0
    %390 = vmatpush.xpose.msra.mxu0 0.0
    %391 = vmatpush.xpose.msra.mxu0 0.0
    %392 = vmatpush.xpose.msra.mxu0 0.0
    %393 = vmatpush.xpose.msra.mxu0 0.0
    %394 = vmatpush.xpose.msra.mxu0 0.0
    %395 = vmatpush.xpose.msra.mxu0 0.0
    %396 = vmatpush.xpose.msra.mxu0 0.0
    %397 = vmatpush.xpose.msra.mxu0 0.0
    %398 = vmatpush.xpose.msra.mxu0 0.0
    %399 = vmatpush.xpose.msra.mxu0 0.0
    %400 = vmatpush.xpose.msra.mxu0 0.0
    %401 = vmatpush.xpose.msra.mxu0 %v384
    %402 = vmatmul.f32.gmra.mxu0 %v381
    %v403 = vpop.f32.mrf.mxu0
    %v404 = vadd.f32 0.0, %v403
    %405 = vdwg.mxu0
    %v407 = vsel %vm162, %v315, 0
    %v410 = vsel %vm162, %v347, 0
    %412 = vmatpush.xpose.msra.mxu0 0.0
    %413 = vmatpush.xpose.msra.mxu0 0.0
    %414 = vmatpush.xpose.msra.mxu0 0.0
    %415 = vmatpush.xpose.msra.mxu0 0.0
    %416 = vmatpush.xpose.msra.mxu0 0.0
    %417 = vmatpush.xpose.msra.mxu0 0.0
    %418 = vmatpush.xpose.msra.mxu0 0.0
    %419 = vmatpush.xpose.msra.mxu0 0.0
    %420 = vmatpush.xpose.msra.mxu0 0.0
    %421 = vmatpush.xpose.msra.mxu0 0.0
    %422 = vmatpush.xpose.msra.mxu0 0.0
    %423 = vmatpush.xpose.msra.mxu0 0.0
    %424 = vmatpush.xpose.msra.mxu0 0.0
    %425 = vmatpush.xpose.msra.mxu0 0.0
    %426 = vmatpush.xpose.msra.mxu0 0.0
    %427 = vmatpush.xpose.msra.mxu0 %v410
    %428 = vmatmul.f32.gmra.mxu0 %v407
    %v429 = vpop.f32.mrf.mxu0
    %v430 = vadd.f32 0.0, %v429
    %431 = vdwg.mxu0
    %v432 = vsel %vm162, %v404, -inf
    %433 = vmax.xlane.f32.xlu0 %v432
    %v434 = vpop.xlane.xlu0 %433
    %v435 = vsel %vm162, %v430, -inf
    %436 = vmax.xlane.f32.xlu0 %v435
    %v437 = vpop.xlane.xlu0 %436
    %v438 = vsub.f32 %v404, %v434
    %v439 = vsub.f32 %v430, %v437
    %v440 = vmul.f32 %v438, 1.442695
    %v441 = vpow.pop %v440
    %v442 = vmul.f32 %v439, 1.442695
    %v443 = vpow.pop %v442
    %v444 = vsel %vm162, %v441, 0.0
    %445 = vadd.xlane.f32.xlu0 %v444
    %v446 = vpop.xlane.xlu0 %445
    %v447 = vsel %vm162, %v443, 0.0
    %448 = vadd.xlane.f32.xlu0 %v447
    %v449 = vpop.xlane.xlu0 %448
    %v450 = vrcp.pop %v446
    %v451 = vrcp.pop %v449
    %v452 = vmul.f32 %v441, %v450
    %v453 = vmul.f32 %v443, %v451
    %v455 = vsel %vm162, %v452, 0
    %457 = vmatpush.msra.mxu0 0.0
    %458 = vmatpush.msra.mxu0 0.0
    %459 = vmatpush.msra.mxu0 0.0
    %460 = vmatpush.msra.mxu0 0.0
    %461 = vmatpush.msra.mxu0 0.0
    %462 = vmatpush.msra.mxu0 0.0
    %463 = vmatpush.msra.mxu0 0.0
    %464 = vmatpush.msra.mxu0 0.0
    %465 = vmatpush.msra.mxu0 0.0
    %466 = vmatpush.msra.mxu0 0.0
    %467 = vmatpush.msra.mxu0 0.0
    %468 = vmatpush.msra.mxu0 0.0
    %469 = vmatpush.msra.mxu0 0.0
    %470 = vmatpush.msra.mxu0 0.0
    %471 = vmatpush.msra.mxu0 0.0
    %472 = vmatpush.msra.mxu0 %v375
    %473 = vmatmul.f32.gmra.mxu0 %v455
    %v474 = vpop.f32.mrf.mxu0
    %v475 = vadd.f32 0.0, %v474
    %476 = vdwg.mxu0
    %v478 = vsel %vm162, %v453, 0
    %480 = vmatpush.msra.mxu0 0.0
    %481 = vmatpush.msra.mxu0 0.0
    %482 = vmatpush.msra.mxu0 0.0
    %483 = vmatpush.msra.mxu0 0.0
    %484 = vmatpush.msra.mxu0 0.0
    %485 = vmatpush.msra.mxu0 0.0
    %486 = vmatpush.msra.mxu0 0.0
    %487 = vmatpush.msra.mxu0 0.0
    %488 = vmatpush.msra.mxu0 0.0
    %489 = vmatpush.msra.mxu0 0.0
    %490 = vmatpush.msra.mxu0 0.0
    %491 = vmatpush.msra.mxu0 0.0
    %492 = vmatpush.msra.mxu0 0.0
    %493 = vmatpush.msra.mxu0 0.0
    %494 = vmatpush.msra.mxu0 0.0
    %495 = vmatpush.msra.mxu0 %v378
    %496 = vmatmul.f32.gmra.mxu0 %v478
    %v497 = vpop.f32.mrf.mxu0
    %v498 = vadd.f32 0.0, %v497
    %499 = vdwg.mxu0
    %s500 = scalar_lea.vmem %s6, 8
    %v501 = vld [vmem:[%s500] sm:$0xff]
    %v503 = vsel %vm162, %v475, 0
    %v506 = vsel %vm162, %v498, 0
    %508 = vmatpush.msra.mxu0 0.0
    %509 = vmatpush.msra.mxu0 0.0
    %510 = vmatpush.msra.mxu0 0.0
    %511 = vmatpush.msra.mxu0 0.0
    %512 = vmatpush.msra.mxu0 0.0
    %513 = vmatpush.msra.mxu0 0.0
    %514 = vmatpush.msra.mxu0 0.0
    %515 = vmatpush.msra.mxu0 0.0
    %516 = vmatpush.msra.mxu0 0.0
    %517 = vmatpush.msra.mxu0 0.0
    %518 = vmatpush.msra.mxu0 0.0
    %519 = vmatpush.msra.mxu0 0.0
    %520 = vmatpush.msra.mxu0 0.0
    %521 = vmatpush.msra.mxu0 0.0
    %522 = vmatpush.msra.mxu0 0.0
    %523 = vmatpush.msra.mxu0 %v501
    %524 = vmatmul.f32.gmra.mxu0 %v503
    %v525 = vpop.f32.mrf.mxu0
    %v526 = vadd.f32 0.0, %v525
    %527 = vmatmul.f32.gmra.mxu0 %v506
    %v528 = vpop.f32.mrf.mxu0
    %v529 = vadd.f32 0.0, %v528
    %530 = vdwg.mxu0
    %v532 = vsel %vm162, %v258, 0
    %v535 = vsel %vm162, %v281, 0
    %537 = vmatpush.msra.mxu0 0.0
    %538 = vmatpush.msra.mxu0 0.0
    %539 = vmatpush.msra.mxu0 0.0
    %540 = vmatpush.msra.mxu0 0.0
    %541 = vmatpush.msra.mxu0 0.0
    %542 = vmatpush.msra.mxu0 0.0
    %543 = vmatpush.msra.mxu0 0.0
    %544 = vmatpush.msra.mxu0 0.0
    %545 = vmatpush.msra.mxu0 0.0
    %546 = vmatpush.msra.mxu0 0.0
    %547 = vmatpush.msra.mxu0 0.0
    %548 = vmatpush.msra.mxu0 0.0
    %549 = vmatpush.msra.mxu0 0.0
    %550 = vmatpush.msra.mxu0 0.0
    %551 = vmatpush.msra.mxu0 0.0
    %552 = vmatpush.msra.mxu0 %v283
    %553 = vmatmul.f32.gmra.mxu0 %v532
    %v554 = vpop.f32.mrf.mxu0
    %v555 = vadd.f32 %v526, %v554
    %556 = vmatmul.f32.gmra.mxu0 %v535
    %v557 = vpop.f32.mrf.mxu0
    %v558 = vadd.f32 %v529, %v557
    %559 = vdwg.mxu0
    %s560 = scalar_lea.vmem %s3, 64
    %v561 = vld [vmem:[%s560] sm:$0xff]
    %v562 = vld [vmem:[%s560 + $0x8] sm:$0xff]
    %v563 = vld [vmem:[%s560 + $0x10] sm:$0xff]
    %v564 = vld [vmem:[%s560 + $0x18] sm:$0xff]
    %s565 = scalar_lea.vmem %s7, 2
    %v566 = vld [vmem:[%s565] sm:$0x1]
    %v568 = vperm.slane %v566, 0
    %570 = vmatpush.msra.mxu0 0.0
    %571 = vmatpush.msra.mxu0 0.0
    %572 = vmatpush.msra.mxu0 0.0
    %573 = vmatpush.msra.mxu0 0.0
    %574 = vmatpush.msra.mxu0 0.0
    %575 = vmatpush.msra.mxu0 0.0
    %576 = vmatpush.msra.mxu0 0.0
    %577 = vmatpush.msra.mxu0 0.0
    %578 = vmatpush.msra.mxu0 0.0
    %579 = vmatpush.msra.mxu0 0.0
    %580 = vmatpush.msra.mxu0 0.0
    %581 = vmatpush.msra.mxu0 0.0
    %582 = vmatpush.msra.mxu0 %v564
    %583 = vmatpush.msra.mxu0 %v563
    %584 = vmatpush.msra.mxu0 %v562
    %585 = vmatpush.msra.mxu0 %v561
    %586 = vmatmul.f32.gmra.mxu0 %v61
    %v587 = vpop.f32.mrf.mxu0
    %v588 = vadd.f32 %v568, %v587
    %589 = vmatmul.f32.gmra.mxu0 %v64
    %v590 = vpop.f32.mrf.mxu0
    %v591 = vadd.f32 %v568, %v590
    %592 = vdwg.mxu0
    %s593 = scalar_lea.vmem %s4, 48
    %v594 = vld [vmem:[%s593] sm:$0xff]
    %v595 = vld [vmem:[%s593 + $0x8] sm:$0xff]
    %v596 = vld [vmem:[%s593 + $0x10] sm:$0xff]
    %s597 = scalar_lea.vmem %s8, 2
    %v598 = vld [vmem:[%s597] sm:$0x1]
    %v600 = vperm.slane %v598, 0
    %602 = vmatpush.msra.mxu0 0.0
    %603 = vmatpush.msra.mxu0 0.0
    %604 = vmatpush.msra.mxu0 0.0
    %605 = vmatpush.msra.mxu0 0.0
    %606 = vmatpush.msra.mxu0 0.0
    %607 = vmatpush.msra.mxu0 0.0
    %608 = vmatpush.msra.mxu0 0.0
    %609 = vmatpush.msra.mxu0 0.0
    %610 = vmatpush.msra.mxu0 0.0
    %611 = vmatpush.msra.mxu0 0.0
    %612 = vmatpush.msra.mxu0 0.0
    %613 = vmatpush.msra.mxu0 0.0
    %614 = vmatpush.msra.mxu0 0.0
    %615 = vmatpush.msra.mxu0 %v596
    %616 = vmatpush.msra.mxu0 %v595
    %617 = vmatpush.msra.mxu0 %v594
    %618 = vmatmul.f32.gmra.mxu0 %v98
    %v619 = vpop.f32.mrf.mxu0
    %v620 = vadd.f32 %v600, %v619
    %621 = vmatmul.f32.gmra.mxu0 %v101
    %v622 = vpop.f32.mrf.mxu0
    %v623 = vadd.f32 %v600, %v622
    %624 = vdwg.mxu0
    %s625 = scalar_lea.vmem %s5, 32
    %v626 = vld [vmem:[%s625] sm:$0xff]
    %v627 = vld [vmem:[%s625 + $0x8] sm:$0xff]
    %s628 = scalar_lea.vmem %s9, 2
    %v629 = vld [vmem:[%s628] sm:$0x1]
    %v631 = vperm.slane %v629, 0
    %633 = vmatpush.msra.mxu0 0.0
    %634 = vmatpush.msra.mxu0 0.0
    %635 = vmatpush.msra.mxu0 0.0
    %636 = vmatpush.msra.mxu0 0.0
    %637 = vmatpush.msra.mxu0 0.0
    %638 = vmatpush.msra.mxu0 0.0
    %639 = vmatpush.msra.mxu0 0.0
    %640 = vmatpush.msra.mxu0 0.0
    %641 = vmatpush.msra.mxu0 0.0
    %642 = vmatpush.msra.mxu0 0.0
    %643 = vmatpush.msra.mxu0 0.0
    %644 = vmatpush.msra.mxu0 0.0
    %645 = vmatpush.msra.mxu0 0.0
    %646 = vmatpush.msra.mxu0 0.0
    %647 = vmatpush.msra.mxu0 %v627
    %648 = vmatpush.msra.mxu0 %v626
    %649 = vmatmul.f32.gmra.mxu0 %v134
    %v650 = vpop.f32.mrf.mxu0
    %v651 = vadd.f32 %v631, %v650
    %652 = vmatmul.f32.gmra.mxu0 %v137
    %v653 = vpop.f32.mrf.mxu0
    %v654 = vadd.f32 %v631, %v653
    %655 = vdwg.mxu0
    %v657 = vsel %vm162, %v588, 0
    %v660 = vsel %vm162, %v620, 0
    %662 = vmatpush.xpose.msra.mxu0 0.0
    %663 = vmatpush.xpose.msra.mxu0 0.0
    %664 = vmatpush.xpose.msra.mxu0 0.0
    %665 = vmatpush.xpose.msra.mxu0 0.0
    %666 = vmatpush.xpose.msra.mxu0 0.0
    %667 = vmatpush.xpose.msra.mxu0 0.0
    %668 = vmatpush.xpose.msra.mxu0 0.0
    %669 = vmatpush.xpose.msra.mxu0 0.0
    %670 = vmatpush.xpose.msra.mxu0 0.0
    %671 = vmatpush.xpose.msra.mxu0 0.0
    %672 = vmatpush.xpose.msra.mxu0 0.0
    %673 = vmatpush.xpose.msra.mxu0 0.0
    %674 = vmatpush.xpose.msra.mxu0 0.0
    %675 = vmatpush.xpose.msra.mxu0 0.0
    %676 = vmatpush.xpose.msra.mxu0 0.0
    %677 = vmatpush.xpose.msra.mxu0 %v660
    %678 = vmatmul.f32.gmra.mxu0 %v657
    %v679 = vpop.f32.mrf.mxu0
    %v680 = vadd.f32 0.0, %v679
    %681 = vdwg.mxu0
    %v683 = vsel %vm162, %v591, 0
    %v686 = vsel %vm162, %v623, 0
    %688 = vmatpush.xpose.msra.mxu0 0.0
    %689 = vmatpush.xpose.msra.mxu0 0.0
    %690 = vmatpush.xpose.msra.mxu0 0.0
    %691 = vmatpush.xpose.msra.mxu0 0.0
    %692 = vmatpush.xpose.msra.mxu0 0.0
    %693 = vmatpush.xpose.msra.mxu0 0.0
    %694 = vmatpush.xpose.msra.mxu0 0.0
    %695 = vmatpush.xpose.msra.mxu0 0.0
    %696 = vmatpush.xpose.msra.mxu0 0.0
    %697 = vmatpush.xpose.msra.mxu0 0.0
    %698 = vmatpush.xpose.msra.mxu0 0.0
    %699 = vmatpush.xpose.msra.mxu0 0.0
    %700 = vmatpush.xpose.msra.mxu0 0.0
    %701 = vmatpush.xpose.msra.mxu0 0.0
    %702 = vmatpush.xpose.msra.mxu0 0.0
    %703 = vmatpush.xpose.msra.mxu0 %v686
    %704 = vmatmul.f32.gmra.mxu0 %v683
    %v705 = vpop.f32.mrf.mxu0
    %v706 = vadd.f32 0.0, %v705
    %707 = vdwg.mxu0
    %v708 = vsel %vm162, %v680, -inf
    %709 = vmax.xlane.f32.xlu0 %v708
    %v710 = vpop.xlane.xlu0 %709
    %v711 = vsel %vm162, %v706, -inf
    %712 = vmax.xlane.f32.xlu0 %v711
    %v713 = vpop.xlane.xlu0 %712
    %v714 = vsub.f32 %v680, %v710
    %v715 = vsub.f32 %v706, %v713
    %v716 = vmul.f32 %v714, 1.442695
    %v717 = vpow.pop %v716
    %v718 = vmul.f32 %v715, 1.442695
    %v719 = vpow.pop %v718
    %v720 = vsel %vm162, %v717, 0.0
    %721 = vadd.xlane.f32.xlu0 %v720
    %v722 = vpop.xlane.xlu0 %721
    %v723 = vsel %vm162, %v719, 0.0
    %724 = vadd.xlane.f32.xlu0 %v723
    %v725 = vpop.xlane.xlu0 %724
    %v726 = vrcp.pop %v722
    %v727 = vrcp.pop %v725
    %v728 = vmul.f32 %v717, %v726
    %v729 = vmul.f32 %v719, %v727
    %v731 = vsel %vm162, %v728, 0
    %733 = vmatpush.msra.mxu0 0.0
    %734 = vmatpush.msra.mxu0 0.0
    %735 = vmatpush.msra.mxu0 0.0
    %736 = vmatpush.msra.mxu0 0.0
    %737 = vmatpush.msra.mxu0 0.0
    %738 = vmatpush.msra.mxu0 0.0
    %739 = vmatpush.msra.mxu0 0.0
    %740 = vmatpush.msra.mxu0 0.0
    %741 = vmatpush.msra.mxu0 0.0
    %742 = vmatpush.msra.mxu0 0.0
    %743 = vmatpush.msra.mxu0 0.0
    %744 = vmatpush.msra.mxu0 0.0
    %745 = vmatpush.msra.mxu0 0.0
    %746 = vmatpush.msra.mxu0 0.0
    %747 = vmatpush.msra.mxu0 0.0
    %748 = vmatpush.msra.mxu0 %v651
    %749 = vmatmul.f32.gmra.mxu0 %v731
    %v750 = vpop.f32.mrf.mxu0
    %v751 = vadd.f32 0.0, %v750
    %752 = vdwg.mxu0
    %v754 = vsel %vm162, %v729, 0
    %756 = vmatpush.msra.mxu0 0.0
    %757 = vmatpush.msra.mxu0 0.0
    %758 = vmatpush.msra.mxu0 0.0
    %759 = vmatpush.msra.mxu0 0.0
    %760 = vmatpush.msra.mxu0 0.0
    %761 = vmatpush.msra.mxu0 0.0
    %762 = vmatpush.msra.mxu0 0.0
    %763 = vmatpush.msra.mxu0 0.0
    %764 = vmatpush.msra.mxu0 0.0
    %765 = vmatpush.msra.mxu0 0.0
    %766 = vmatpush.msra.mxu0 0.0
    %767 = vmatpush.msra.mxu0 0.0
    %768 = vmatpush.msra.mxu0 0.0
    %769 = vmatpush.msra.mxu0 0.0
    %770 = vmatpush.msra.mxu0 0.0
    %771 = vmatpush.msra.mxu0 %v654
    %772 = vmatmul.f32.gmra.mxu0 %v754
    %v773 = vpop.f32.mrf.mxu0
    %v774 = vadd.f32 0.0, %v773
    %775 = vdwg.mxu0
    %s776 = scalar_lea.vmem %s6, 16
    %v777 = vld [vmem:[%s776] sm:$0xff]
    %v779 = vsel %vm162, %v751, 0
    %v782 = vsel %vm162, %v774, 0
    %784 = vmatpush.msra.mxu0 0.0
    %785 = vmatpush.msra.mxu0 0.0
    %786 = vmatpush.msra.mxu0 0.0
    %787 = vmatpush.msra.mxu0 0.0
    %788 = vmatpush.msra.mxu0 0.0
    %789 = vmatpush.msra.mxu0 0.0
    %790 = vmatpush.msra.mxu0 0.0
    %791 = vmatpush.msra.mxu0 0.0
    %792 = vmatpush.msra.mxu0 0.0
    %793 = vmatpush.msra.mxu0 0.0
    %794 = vmatpush.msra.mxu0 0.0
    %795 = vmatpush.msra.mxu0 0.0
    %796 = vmatpush.msra.mxu0 0.0
    %797 = vmatpush.msra.mxu0 0.0
    %798 = vmatpush.msra.mxu0 0.0
    %799 = vmatpush.msra.mxu0 %v777
    %800 = vmatmul.f32.gmra.mxu0 %v779
    %v801 = vpop.f32.mrf.mxu0
    %v802 = vadd.f32 0.0, %v801
    %803 = vmatmul.f32.gmra.mxu0 %v782
    %v804 = vpop.f32.mrf.mxu0
    %v805 = vadd.f32 0.0, %v804
    %806 = vdwg.mxu0
    %v807 = vadd.f32 %v555, %v802
    %v808 = vadd.f32 %v558, %v805
    %s809 = scalar_lea.vmem %s3, 96
    %v810 = vld [vmem:[%s809] sm:$0xff]
    %v811 = vld [vmem:[%s809 + $0x8] sm:$0xff]
    %v812 = vld [vmem:[%s809 + $0x10] sm:$0xff]
    %v813 = vld [vmem:[%s809 + $0x18] sm:$0xff]
    %s814 = scalar_lea.vmem %s7, 3
    %v815 = vld [vmem:[%s814] sm:$0x1]
    %v817 = vperm.slane %v815, 0
    %819 = vmatpush.msra.mxu0 0.0
    %820 = vmatpush.msra.mxu0 0.0
    %821 = vmatpush.msra.mxu0 0.0
    %822 = vmatpush.msra.mxu0 0.0
    %823 = vmatpush.msra.mxu0 0.0
    %824 = vmatpush.msra.mxu0 0.0
    %825 = vmatpush.msra.mxu0 0.0
    %826 = vmatpush.msra.mxu0 0.0
    %827 = vmatpush.msra.mxu0 0.0
    %828 = vmatpush.msra.mxu0 0.0
    %829 = vmatpush.msra.mxu0 0.0
    %830 = vmatpush.msra.mxu0 0.0
    %831 = vmatpush.msra.mxu0 %v813
    %832 = vmatpush.msra.mxu0 %v812
    %833 = vmatpush.msra.mxu0 %v811
    %834 = vmatpush.msra.mxu0 %v810
    %835 = vmatmul.f32.gmra.mxu0 %v61
    %v836 = vpop.f32.mrf.mxu0
    %v837 = vadd.f32 %v817, %v836
    %838 = vmatmul.f32.gmra.mxu0 %v64
    %v839 = vpop.f32.mrf.mxu0
    %v840 = vadd.f32 %v817, %v839
    %841 = vdwg.mxu0
    %s842 = scalar_lea.vmem %s4, 72
    %v843 = vld [vmem:[%s842] sm:$0xff]
    %v844 = vld [vmem:[%s842 + $0x8] sm:$0xff]
    %v845 = vld [vmem:[%s842 + $0x10] sm:$0xff]
    %s846 = scalar_lea.vmem %s8, 3
    %v847 = vld [vmem:[%s846] sm:$0x1]
    %v849 = vperm.slane %v847, 0
    %851 = vmatpush.msra.mxu0 0.0
    %852 = vmatpush.msra.mxu0 0.0
    %853 = vmatpush.msra.mxu0 0.0
    %854 = vmatpush.msra.mxu0 0.0
    %855 = vmatpush.msra.mxu0 0.0
    %856 = vmatpush.msra.mxu0 0.0
    %857 = vmatpush.msra.mxu0 0.0
    %858 = vmatpush.msra.mxu0 0.0
    %859 = vmatpush.msra.mxu0 0.0
    %860 = vmatpush.msra.mxu0 0.0
    %861 = vmatpush.msra.mxu0 0.0
    %862 = vmatpush.msra.mxu0 0.0
    %863 = vmatpush.msra.mxu0 0.0
    %864 = vmatpush.msra.mxu0 %v845
    %865 = vmatpush.msra.mxu0 %v844
    %866 = vmatpush.msra.mxu0 %v843
    %867 = vmatmul.f32.gmra.mxu0 %v98
    %v868 = vpop.f32.mrf.mxu0
    %v869 = vadd.f32 %v849, %v868
    %870 = vmatmul.f32.gmra.mxu0 %v101
    %v871 = vpop.f32.mrf.mxu0
    %v872 = vadd.f32 %v849, %v871
    %873 = vdwg.mxu0
    %s874 = scalar_lea.vmem %s5, 48
    %v875 = vld [vmem:[%s874] sm:$0xff]
    %v876 = vld [vmem:[%s874 + $0x8] sm:$0xff]
    %s877 = scalar_lea.vmem %s9, 3
    %v878 = vld [vmem:[%s877] sm:$0x1]
    %v880 = vperm.slane %v878, 0
    %882 = vmatpush.msra.mxu0 0.0
    %883 = vmatpush.msra.mxu0 0.0
    %884 = vmatpush.msra.mxu0 0.0
    %885 = vmatpush.msra.mxu0 0.0
    %886 = vmatpush.msra.mxu0 0.0
    %887 = vmatpush.msra.mxu0 0.0
    %888 = vmatpush.msra.mxu0 0.0
    %889 = vmatpush.msra.mxu0 0.0
    %890 = vmatpush.msra.mxu0 0.0
    %891 = vmatpush.msra.mxu0 0.0
    %892 = vmatpush.msra.mxu0 0.0
    %893 = vmatpush.msra.mxu0 0.0
    %894 = vmatpush.msra.mxu0 0.0
    %895 = vmatpush.msra.mxu0 0.0
    %896 = vmatpush.msra.mxu0 %v876
    %897 = vmatpush.msra.mxu0 %v875
    %898 = vmatmul.f32.gmra.mxu0 %v134
    %v899 = vpop.f32.mrf.mxu0
    %v900 = vadd.f32 %v880, %v899
    %901 = vmatmul.f32.gmra.mxu0 %v137
    %v902 = vpop.f32.mrf.mxu0
    %v903 = vadd.f32 %v880, %v902
    %904 = vdwg.mxu0
    %v906 = vsel %vm162, %v837, 0
    %v909 = vsel %vm162, %v869, 0
    %911 = vmatpush.xpose.msra.mxu0 0.0
    %912 = vmatpush.xpose.msra.mxu0 0.0
    %913 = vmatpush.xpose.msra.mxu0 0.0
    %914 = vmatpush.xpose.msra.mxu0 0.0
    %915 = vmatpush.xpose.msra.mxu0 0.0
    %916 = vmatpush.xpose.msra.mxu0 0.0
    %917 = vmatpush.xpose.msra.mxu0 0.0
    %918 = vmatpush.xpose.msra.mxu0 0.0
    %919 = vmatpush.xpose.msra.mxu0 0.0
    %920 = vmatpush.xpose.msra.mxu0 0.0
    %921 = vmatpush.xpose.msra.mxu0 0.0
    %922 = vmatpush.xpose.msra.mxu0 0.0
    %923 = vmatpush.xpose.msra.mxu0 0.0
    %924 = vmatpush.xpose.msra.mxu0 0.0
    %925 = vmatpush.xpose.msra.mxu0 0.0
    %926 = vmatpush.xpose.msra.mxu0 %v909
    %927 = vmatmul.f32.gmra.mxu0 %v906
    %v928 = vpop.f32.mrf.mxu0
    %v929 = vadd.f32 0.0, %v928
    %930 = vdwg.mxu0
    %v932 = vsel %vm162, %v840, 0
    %v935 = vsel %vm162, %v872, 0
    %937 = vmatpush.xpose.msra.mxu0 0.0
    %938 = vmatpush.xpose.msra.mxu0 0.0
    %939 = vmatpush.xpose.msra.mxu0 0.0
    %940 = vmatpush.xpose.msra.mxu0 0.0
    %941 = vmatpush.xpose.msra.mxu0 0.0
    %942 = vmatpush.xpose.msra.mxu0 0.0
    %943 = vmatpush.xpose.msra.mxu0 0.0
    %944 = vmatpush.xpose.msra.mxu0 0.0
    %945 = vmatpush.xpose.msra.mxu0 0.0
    %946 = vmatpush.xpose.msra.mxu0 0.0
    %947 = vmatpush.xpose.msra.mxu0 0.0
    %948 = vmatpush.xpose.msra.mxu0 0.0
    %949 = vmatpush.xpose.msra.mxu0 0.0
    %950 = vmatpush.xpose.msra.mxu0 0.0
    %951 = vmatpush.xpose.msra.mxu0 0.0
    %952 = vmatpush.xpose.msra.mxu0 %v935
    %953 = vmatmul.f32.gmra.mxu0 %v932
    %v954 = vpop.f32.mrf.mxu0
    %v955 = vadd.f32 0.0, %v954
    %956 = vdwg.mxu0
    %v957 = vsel %vm162, %v929, -inf
    %958 = vmax.xlane.f32.xlu0 %v957
    %v959 = vpop.xlane.xlu0 %958
    %v960 = vsel %vm162, %v955, -inf
    %961 = vmax.xlane.f32.xlu0 %v960
    %v962 = vpop.xlane.xlu0 %961
    %v963 = vsub.f32 %v929, %v959
    %v964 = vsub.f32 %v955, %v962
    %v965 = vmul.f32 %v963, 1.442695
    %v966 = vpow.pop %v965
    %v967 = vmul.f32 %v964, 1.442695
    %v968 = vpow.pop %v967
    %v969 = vsel %vm162, %v966, 0.0
    %970 = vadd.xlane.f32.xlu0 %v969
    %v971 = vpop.xlane.xlu0 %970
    %v972 = vsel %vm162, %v968, 0.0
    %973 = vadd.xlane.f32.xlu0 %v972
    %v974 = vpop.xlane.xlu0 %973
    %v975 = vrcp.pop %v971
    %v976 = vrcp.pop %v974
    %v977 = vmul.f32 %v966, %v975
    %v978 = vmul.f32 %v968, %v976
    %v980 = vsel %vm162, %v977, 0
    %982 = vmatpush.msra.mxu0 0.0
    %983 = vmatpush.msra.mxu0 0.0
    %984 = vmatpush.msra.mxu0 0.0
    %985 = vmatpush.msra.mxu0 0.0
    %986 = vmatpush.msra.mxu0 0.0
    %987 = vmatpush.msra.mxu0 0.0
    %988 = vmatpush.msra.mxu0 0.0
    %989 = vmatpush.msra.mxu0 0.0
    %990 = vmatpush.msra.mxu0 0.0
    %991 = vmatpush.msra.mxu0 0.0
    %992 = vmatpush.msra.mxu0 0.0
    %993 = vmatpush.msra.mxu0 0.0
    %994 = vmatpush.msra.mxu0 0.0
    %995 = vmatpush.msra.mxu0 0.0
    %996 = vmatpush.msra.mxu0 0.0
    %997 = vmatpush.msra.mxu0 %v900
    %998 = vmatmul.f32.gmra.mxu0 %v980
    %v999 = vpop.f32.mrf.mxu0
    %v1000 = vadd.f32 0.0, %v999
    %1001 = vdwg.mxu0
    %v1003 = vsel %vm162, %v978, 0
    %1005 = vmatpush.msra.mxu0 0.0
    %1006 = vmatpush.msra.mxu0 0.0
    %1007 = vmatpush.msra.mxu0 0.0
    %1008 = vmatpush.msra.mxu0 0.0
    %1009 = vmatpush.msra.mxu0 0.0
    %1010 = vmatpush.msra.mxu0 0.0
    %1011 = vmatpush.msra.mxu0 0.0
    %1012 = vmatpush.msra.mxu0 0.0
    %1013 = vmatpush.msra.mxu0 0.0
    %1014 = vmatpush.msra.mxu0 0.0
    %1015 = vmatpush.msra.mxu0 0.0
    %1016 = vmatpush.msra.mxu0 0.0
    %1017 = vmatpush.msra.mxu0 0.0
    %1018 = vmatpush.msra.mxu0 0.0
    %1019 = vmatpush.msra.mxu0 0.0
    %1020 = vmatpush.msra.mxu0 %v903
    %1021 = vmatmul.f32.gmra.mxu0 %v1003
    %v1022 = vpop.f32.mrf.mxu0
    %v1023 = vadd.f32 0.0, %v1022
    %1024 = vdwg.mxu0
    %s1025 = scalar_lea.vmem %s6, 24
    %v1026 = vld [vmem:[%s1025] sm:$0xff]
    %v1028 = vsel %vm162, %v1000, 0
    %v1031 = vsel %vm162, %v1023, 0
    %1033 = vmatpush.msra.mxu0 0.0
    %1034 = vmatpush.msra.mxu0 0.0
    %1035 = vmatpush.msra.mxu0 0.0
    %1036 = vmatpush.msra.mxu0 0.0
    %1037 = vmatpush.msra.mxu0 0.0
    %1038 = vmatpush.msra.mxu0 0.0
    %1039 = vmatpush.msra.mxu0 0.0
    %1040 = vmatpush.msra.mxu0 0.0
    %1041 = vmatpush.msra.mxu0 0.0
    %1042 = vmatpush.msra.mxu0 0.0
    %1043 = vmatpush.msra.mxu0 0.0
    %1044 = vmatpush.msra.mxu0 0.0
    %1045 = vmatpush.msra.mxu0 0.0
    %1046 = vmatpush.msra.mxu0 0.0
    %1047 = vmatpush.msra.mxu0 0.0
    %1048 = vmatpush.msra.mxu0 %v1026
    %1049 = vmatmul.f32.gmra.mxu0 %v1028
    %v1050 = vpop.f32.mrf.mxu0
    %v1051 = vadd.f32 0.0, %v1050
    %1052 = vmatmul.f32.gmra.mxu0 %v1031
    %v1053 = vpop.f32.mrf.mxu0
    %v1054 = vadd.f32 0.0, %v1053
    %1055 = vdwg.mxu0
    %v1056 = vadd.f32 %v807, %v1051
    %v1057 = vadd.f32 %v808, %v1054
    %v1058 = vld [vmem:[%s10] sm:$0x1]
    %v1060 = vperm.slane %v1058, 0
    %v1062 = vadd.f32 %v1056, %v1060
    %v1063 = vadd.f32 %v1057, %v1060
    %v1064 = vadd.f32 %v45, %v1062
    %v1065 = vadd.f32 %v46, %v1063
    %v1066 = vsel %vm59, %v1064, 0.0
    %1067 = vadd.xlane.f32.xlu0 %v1066
    %v1068 = vpop.xlane.xlu0 %1067
    %v1069 = vsel %vm59, %v1065, 0.0
    %1070 = vadd.xlane.f32.xlu0 %v1069
    %v1071 = vpop.xlane.xlu0 %1070
    %v1072 = vrcp.pop 32.0
    %v1073 = vmul.f32 32.0, %v1072
    %v1074 = vsub.f32 1.0, %v1073
    %v1075 = vmul.f32 %v1072, %v1074
    %v1076 = vadd.f32 %v1072, %v1075
    %vm1077 = vweird.f32 %v1072
    %v1078 = vsel %vm1077, %v1072, %v1076
    %v1079 = vmul.f32 %v1068, %v1078
    %v1080 = vmul.f32 %v1071, %v1078
    %v1081 = vsub.f32 %v1064, %v1079
    %v1082 = vsub.f32 %v1065, %v1080
    %v1083 = vmul.f32 %v1081, %v1081
    %v1084 = vmul.f32 %v1082, %v1082
    %v1085 = vsel %vm59, %v1083, 0.0
    %1086 = vadd.xlane.f32.xlu0 %v1085
    %v1087 = vpop.xlane.xlu0 %1086
    %v1088 = vsel %vm59, %v1084, 0.0
    %1089 = vadd.xlane.f32.xlu0 %v1088
    %v1090 = vpop.xlane.xlu0 %1089
    %v1091 = vmul.f32 %v1087, %v1078
    %v1092 = vmul.f32 %v1090, %v1078
    %v1093 = vadd.f32 %v1091, 1e-05
    %v1094 = vadd.f32 %v1092, 1e-05
    %v1095 = vrsqrt.pop %v1093
    %v1096 = vmul.f32 %v1095, %v1093
    %v1097 = vmul.f32 %v1096, %v1095
    %v1098 = vmul.f32 0.5, %v1097
    %v1099 = vsub.f32 1.5, %v1098
    %v1100 = vmul.f32 %v1095, %v1099
    %vm1101 = vweird.f32 %v1093
    %vm1102 = vweird.f32 %v1095
    %vm1103 = vmor %vm1101, %vm1102
    %v1104 = vsel %vm1103, %v1095, %v1100
    %v1105 = vrsqrt.pop %v1094
    %v1106 = vmul.f32 %v1105, %v1094
    %v1107 = vmul.f32 %v1106, %v1105
    %v1108 = vmul.f32 0.5, %v1107
    %v1109 = vsub.f32 1.5, %v1108
    %v1110 = vmul.f32 %v1105, %v1109
    %vm1111 = vweird.f32 %v1094
    %vm1112 = vweird.f32 %v1105
    %vm1113 = vmor %vm1111, %vm1112
    %v1114 = vsel %vm1113, %v1105, %v1110
    %v1115 = vmul.f32 %v1081, %v1104
    %v1116 = vmul.f32 %v1082, %v1114
    %v1117 = vld [vmem:[%s11] sm:$0x1]
    %v1119 = vperm.slane %v1117, 0
    %v1121 = vmul.f32 %v1115, %v1119
    %v1122 = vmul.f32 %v1116, %v1119
    %v1123 = vld [vmem:[%s12] sm:$0x1]
    %v1125 = vperm.slane %v1123, 0
    %v1127 = vadd.f32 %v1121, %v1125
    %v1128 = vadd.f32 %v1122, %v1125
    %1129 = vst.msk [vmem:[#allocation2] sm:$0xff] %vm59, %v1127
    %1130 = vst.msk [vmem:[#allocation2 + $0x8] sm:$0xff] %vm59, %v1128
    // Predicated region
    $region54: #{tpu_custom_call.1} parent=1 // pred_check
      _
    $region55: #{tpu_custom_call.1} parent=1 // pred_check_branch
      %1132 = sbr.rel (0) target = $region57
    $region56: #{tpu_custom_call.1} parent=1 // pred_region
      %1134 = vsyncadd [#allocation3], 0
      %s1135 = sshll.u32 [#allocation2], 4
      %s1136 = int_to_ptr.vmem [resolvable:$true] %s1135
      %s1137 = sshll.u32 %s13, 4
      %s1138 = int_to_ptr.hbm [resolvable:$true] %s1137
      %1143 = dma.vmem_to_hbm [thread:$0]  %s1136, 256, %s1138, [#allocation3], 128, 128, 8
    $region57: #{tpu_custom_call.1} parent=1 // pred_fallthru
      _
    // Predicated region
    $region58: #{tpu_custom_call.1} parent=1 // pred_check
      _
    $region59: #{tpu_custom_call.1} parent=1 // pred_check_branch
      %1145 = sbr.rel (0) target = $region61
    $region60: #{tpu_custom_call.1} parent=1 // pred_region
      %1147 = dma.done [#allocation3], 256
    $region61: #{tpu_custom_call.1} parent=1 // pred_fallthru
      _
    %1148 = vsyncpa [#allocation3], 1

</llo_original>
